<compile_context>
chip_gen: v7x
topology: tpu7x:2x2x1
jax: 0.10.0
libtpu: 0.0.40
codegen_flags: <defaults>
</compile_context>

<pallas_src>
import functools

import jax
import jax.numpy as jnp
from jax.experimental import pallas as pl
from jax.experimental.pallas import tpu as pltpu


# ------------------------------ fused kernel --------------------------------
def net_kernel(x2_ref, wih0_ref, b0_ref, wbig_ref, b1_ref,
               w2_ref, b2_ref, w3_ref, b3_ref, o_ref,
               xg_ref, h2_ref, *, seq_len, batch_p):
    T, Bp = seq_len, batch_p
    H4 = wih0_ref.shape[1]
    H = H4 // 4
    H2o = w2_ref.shape[1]

    # Hoisted layer-0 input projection: one (T*Bp, I) x (I, 4H) MXU push,
    # parked in VMEM scratch so it does not occupy vregs across the unroll.
    xg_ref[...] = (jnp.dot(x2_ref[...], wih0_ref[...],
                           preferred_element_type=jnp.float32) + b0_ref[...])

    b1 = b1_ref[...]                             # (1, 4H)

    h1 = jnp.zeros((Bp, H), jnp.float32)
    h2 = jnp.zeros((Bp, H), jnp.float32)
    c1 = jnp.zeros((Bp, H), jnp.float32)
    c2 = jnp.zeros((Bp, H), jnp.float32)
    rec0 = jnp.zeros((Bp, H4), jnp.float32)      # h1(t-1) @ W_hh0 (h1(-1) == 0)

    def cell(g, c):
        # g-gate lanes of `g` were pre-scaled by 2 at trace time, so ONE
        # full-width sigmoid gives i/f/o AND tanh(g) = 2*sigmoid(2g) - 1.
        s = jax.nn.sigmoid(g)                                    # (Bp, 4H) EUP
        gg = 2.0 * s[:, 2 * H:3 * H] - 1.0                       # tanh(g)
        c_new = s[:, H:2 * H] * c + s[:, 0:H] * gg
        h_new = s[:, 3 * H:4 * H] * jnp.tanh(c_new)
        return h_new, c_new

    # Fully unrolled time loop (T small & static): state stays in vregs,
    # indices are static, no per-step grid/DMA overhead.
    for t in range(T):
        # ---- layer 0: recurrent term was produced by last step's fused push
        g0 = xg_ref[pl.ds(t * Bp, Bp), :] + rec0                 # (Bp, 4H)
        h1, c1 = cell(g0, c1)

        # ---- single fused MXU push: layer-1 gates + next-step layer-0 rec ---
        big = jnp.dot(jnp.concatenate([h1, h2], axis=1), wbig_ref[...],
                      preferred_element_type=jnp.float32)        # (Bp, 8H)
        g1 = big[:, 0:H4] + b1
        rec0 = big[:, H4:2 * H4]                                 # h1(t) @ W_hh0

        # ---- layer 1 --------------------------------------------------------
        h2, c2 = cell(g1, c2)
        h2_ref[t, :, :] = h2          # off the serial path; head reads it later

    # ------------- head: softmax(dim=0) -> fc2 -> softmax(dim=0) -> fc3 ------
    def softmax_time(x3):
        # Softmax over the leading (time) axis of a (T, Bp, D) tile via a
        # log-depth pairwise tree + one full-tile exp + approx reciprocal.
        def tree(x, op):
            n = x.shape[0]
            if n == 1:
                return x
            h = n // 2
            return op(tree(x[:h], op), tree(x[h:], op))
        m = tree(x3, jnp.maximum)                                # (1, Bp, D)
        e = jnp.exp(x3 - m)
        den = tree(e, jnp.add)                                   # (1, Bp, D)
        return e * pl.reciprocal(den, approx=True)

    s1 = softmax_time(h2_ref[...])                               # (T, Bp, H)
    y = jnp.dot(s1.reshape(T * Bp, H), w2_ref[...],
                preferred_element_type=jnp.float32) + b2_ref[...]  # (T*Bp, H2)
    s2 = softmax_time(y.reshape(T, Bp, H2o)).reshape(T * Bp, H2o)

    # fc3 (output width 1): VPU multiply + lane reduce; single tiny final store.
    z = jnp.sum(s2 * w3_ref[...], axis=-1, keepdims=True) + b3_ref[...]
    o_ref[...] = z.astype(o_ref.dtype)                           # (T*Bp, 1)


def net_pallas(x, wih0_s, b0_s, w_big, b1_s, w2, b2, w3row, b3):
    T, B, I = x.shape
    Bp = max(8, ((B + 7) // 8) * 8)              # pad batch to full sublanes
    x_p = jnp.pad(x, ((0, 0), (0, Bp - B), (0, 0)))
    x2d = x_p.reshape(T * Bp, I)                 # layout plumbing in the wrapper
    H4 = wih0_s.shape[1]
    H = H4 // 4

    vmem = pl.BlockSpec(memory_space=pltpu.MemorySpace.VMEM)
    out = pl.pallas_call(
        functools.partial(net_kernel, seq_len=T, batch_p=Bp),
        out_shape=jax.ShapeDtypeStruct((T * Bp, 1), jnp.float32),
        in_specs=[vmem] * 9,
        out_specs=vmem,
        scratch_shapes=[pltpu.VMEM((T * Bp, H4), jnp.float32),   # x @ W_ih0 + b0
                        pltpu.VMEM((T, Bp, H), jnp.float32)],    # h2(t) rows
    )(x2d, wih0_s, b0_s, w_big, b1_s, w2, b2, w3row, b3)
    return out.reshape(T, Bp, 1)[:, :B, :]


# ------------------------------- Net wrapper --------------------------------
def init_params(key, input_size, hidden1, hidden2):
    """Deterministic init mimicking PyTorch default uniform(-1/sqrt(H), 1/sqrt(H))."""
    ks = jax.random.split(key, 12)
    k1 = 1.0 / jnp.sqrt(hidden1)

    def u(k, shape, bound):
        return jax.random.uniform(k, shape, jnp.float32, -bound, bound)

    params = {
        # LSTM layer 0 (weights stored transposed: (in, 4H) for x @ W, cols [i|f|g|o])
        "wih0": u(ks[0], (input_size, 4 * hidden1), k1),
        "whh0": u(ks[1], (hidden1, 4 * hidden1), k1),
        "b0":   u(ks[2], (1, 4 * hidden1), k1) + u(ks[3], (1, 4 * hidden1), k1),
        # LSTM layer 1
        "wih1": u(ks[4], (hidden1, 4 * hidden1), k1),
        "whh1": u(ks[5], (hidden1, 4 * hidden1), k1),
        "b1":   u(ks[6], (1, 4 * hidden1), k1) + u(ks[7], (1, 4 * hidden1), k1),
        # fc2
        "w2": u(ks[8], (hidden1, hidden2), 1.0 / jnp.sqrt(hidden1)),
        "b2": u(ks[9], (1, hidden2), 1.0 / jnp.sqrt(hidden1)),
        # fc3
        "w3": u(ks[10], (hidden2, 1), 1.0 / jnp.sqrt(hidden2)),
        "b3": u(ks[11], (1, 1), 1.0 / jnp.sqrt(hidden2)),
    }
    return params


@jax.jit
def net_forward(x, params):
    H = params["whh0"].shape[0]

    # Pre-scale the g-gate column block by 2 so the kernel can recover
    # tanh(g) from the single full-width sigmoid (tanh(z) = 2*sigmoid(2z) - 1).
    def scale_g(w):
        return w.at[..., 2 * H:3 * H].multiply(2.0)

    wih0_s = scale_g(params["wih0"])
    whh0_s = scale_g(params["whh0"])
    b0_s = scale_g(params["b0"])
    wih1_s = scale_g(params["wih1"])
    whh1_s = scale_g(params["whh1"])
    b1_s = scale_g(params["b1"])

    # Fused recurrent weight: [h1(t), h2(t-1)] @ W_big ->
    #   lanes 0:4H  = layer-1 gate preactivation (minus bias)
    #   lanes 4H:8H = h1(t) @ W_hh0 (layer-0 recurrent term for step t+1)
    w_big = jnp.concatenate(
        [jnp.concatenate([wih1_s, whh0_s], axis=1),
         jnp.concatenate([whh1_s, jnp.zeros_like(whh1_s)], axis=1)],
        axis=0)                                                   # (2H, 8H)

    w3row = params["w3"].reshape(1, -1)                           # (1, H2)
    return net_pallas(x, wih0_s, b0_s, w_big, b1_s,
                      params["w2"], params["b2"], w3row, params["b3"])


if __name__ == "__main__":
    T, B = 8, 2
    input_size, hidden1, hidden2 = 16, 32, 32

    key = jax.random.PRNGKey(0)
    kx, kp = jax.random.split(key)
    x = jax.random.normal(kx, (T, B, input_size), jnp.float32)
    params = init_params(kp, input_size, hidden1, hidden2)

    out = net_forward(x, params)
    jax.block_until_ready(out)
    assert out.shape == (T, B, 1), out.shape
    assert bool(jnp.all(jnp.isfinite(out)))
    print("KERNEL_OK")
</pallas_src>

<mosaic_0001>
module attributes {stable_mosaic.version = 11 : i64} {
  func.func @net_kernel(%arg0: memref<64x16xf32, #tpu.memory_space<vmem>>, %arg1: memref<16x128xf32, #tpu.memory_space<vmem>>, %arg2: memref<1x128xf32, #tpu.memory_space<vmem>>, %arg3: memref<64x256xf32, #tpu.memory_space<vmem>>, %arg4: memref<1x128xf32, #tpu.memory_space<vmem>>, %arg5: memref<32x32xf32, #tpu.memory_space<vmem>>, %arg6: memref<1x32xf32, #tpu.memory_space<vmem>>, %arg7: memref<1x32xf32, #tpu.memory_space<vmem>>, %arg8: memref<1x1xf32, #tpu.memory_space<vmem>>, %arg9: memref<64x1xf32, #tpu.memory_space<vmem>>, %arg10: memref<64x128xf32, #tpu.memory_space<vmem>>, %arg11: memref<8x8x32xf32, #tpu.memory_space<vmem>>) attributes {dimension_semantics = [], scalar_prefetch = 0 : i64, scratch_operands = 2 : i64, tpu.core_type = #tpu.core_type<tc>} {
    %c0 = arith.constant 0 : index
    %c0_0 = arith.constant 0 : index
    %0 = vector.load %arg0[%c0, %c0_0] : memref<64x16xf32, #tpu.memory_space<vmem>>, vector<64x16xf32>
    %c0_1 = arith.constant 0 : index
    %c0_2 = arith.constant 0 : index
    %1 = vector.load %arg1[%c0_1, %c0_2] : memref<16x128xf32, #tpu.memory_space<vmem>>, vector<16x128xf32>
    %cst = arith.constant dense<0.000000e+00> : vector<64x128xf32>
    %2 = tpu.matmul %0, %1, %cst {dimension_numbers = #tpu.dot_dimension_numbers<[1], [0], [0], [1], [0, 0, 1, 1], [], []>} : vector<64x16xf32>, vector<16x128xf32>, vector<64x128xf32> -> vector<64x128xf32>
    %c0_3 = arith.constant 0 : index
    %c0_4 = arith.constant 0 : index
    %3 = vector.load %arg2[%c0_3, %c0_4] : memref<1x128xf32, #tpu.memory_space<vmem>>, vector<1x128xf32>
    %4 = vector.broadcast %3 : vector<1x128xf32> to vector<64x128xf32>
    %5 = arith.addf %2, %4 : vector<64x128xf32>
    %c0_5 = arith.constant 0 : index
    %c0_6 = arith.constant 0 : index
    %6 = vector.load %arg10[%c0_5, %c0_6] : memref<64x128xf32, #tpu.memory_space<vmem>>, vector<64x128xf32>
    tpu.vector_store %arg10[%c0_5, %c0_6], %5 {strides = array<i32>} : memref<64x128xf32, #tpu.memory_space<vmem>>, vector<64x128xf32>,
    %c0_7 = arith.constant 0 : index
    %c0_8 = arith.constant 0 : index
    %7 = vector.load %arg4[%c0_7, %c0_8] : memref<1x128xf32, #tpu.memory_space<vmem>>, vector<1x128xf32>
    %cst_9 = arith.constant 0.000000e+00 : f32
    %8 = vector.broadcast %cst_9 : f32 to vector<8x32xf32>
    %cst_10 = arith.constant 0.000000e+00 : f32
    %9 = vector.broadcast %cst_10 : f32 to vector<8x32xf32>
    %cst_11 = arith.constant 0.000000e+00 : f32
    %10 = vector.broadcast %cst_11 : f32 to vector<8x32xf32>
    %cst_12 = arith.constant 0.000000e+00 : f32
    %11 = vector.broadcast %cst_12 : f32 to vector<8x128xf32>
    %c0_13 = arith.constant 0 : index
    %c0_14 = arith.constant 0 : index
    %12 = vector.load %arg10[%c0_13, %c0_14] : memref<64x128xf32, #tpu.memory_space<vmem>>, vector<8x128xf32>
    %13 = arith.addf %12, %11 : vector<8x128xf32>
    %14 = arith.negf %13 : vector<8x128xf32>
    %15 = math.exp %14 : vector<8x128xf32>
    %cst_15 = arith.constant 1.000000e+00 : f32
    %16 = vector.broadcast %cst_15 : f32 to vector<8x128xf32>
    %17 = arith.addf %16, %15 : vector<8x128xf32>
    %18 = arith.divf %16, %17 : vector<8x128xf32>
    %19 = vector.extract_strided_slice %18 {offsets = [0, 64], sizes = [8, 32], strides = [1, 1]} : vector<8x128xf32> to vector<8x32xf32>
    %cst_16 = arith.constant 2.000000e+00 : f32
    %20 = vector.broadcast %cst_16 : f32 to vector<8x32xf32>
    %21 = arith.mulf %20, %19 : vector<8x32xf32>
    %cst_17 = arith.constant 1.000000e+00 : f32
    %22 = vector.broadcast %cst_17 : f32 to vector<8x32xf32>
    %23 = arith.subf %21, %22 : vector<8x32xf32>
    %24 = vector.extract_strided_slice %18 {offsets = [0, 32], sizes = [8, 32], strides = [1, 1]} : vector<8x128xf32> to vector<8x32xf32>
    %25 = arith.mulf %24, %9 : vector<8x32xf32>
    %26 = vector.extract_strided_slice %18 {offsets = [0, 0], sizes = [8, 32], strides = [1, 1]} : vector<8x128xf32> to vector<8x32xf32>
    %27 = arith.mulf %26, %23 : vector<8x32xf32>
    %28 = arith.addf %25, %27 : vector<8x32xf32>
    %29 = vector.extract_strided_slice %18 {offsets = [0, 96], sizes = [8, 32], strides = [1, 1]} : vector<8x128xf32> to vector<8x32xf32>
    %30 = math.tanh %28 : vector<8x32xf32>
    %31 = arith.mulf %29, %30 : vector<8x32xf32>
    %32 = tpu.concatenate %31, %8 in 1 : vector<8x32xf32>, vector<8x32xf32> -> vector<8x64xf32>
    %c0_18 = arith.constant 0 : index
    %c0_19 = arith.constant 0 : index
    %33 = vector.load %arg3[%c0_18, %c0_19] : memref<64x256xf32, #tpu.memory_space<vmem>>, vector<64x256xf32>
    %cst_20 = arith.constant dense<0.000000e+00> : vector<8x256xf32>
    %34 = tpu.matmul %32, %33, %cst_20 {dimension_numbers = #tpu.dot_dimension_numbers<[1], [0], [0], [1], [0, 0, 1, 1], [], []>} : vector<8x64xf32>, vector<64x256xf32>, vector<8x256xf32> -> vector<8x256xf32>
    %35 = vector.extract_strided_slice %34 {offsets = [0, 0], sizes = [8, 128], strides = [1, 1]} : vector<8x256xf32> to vector<8x128xf32>
    %36 = vector.broadcast %7 : vector<1x128xf32> to vector<8x128xf32>
    %37 = arith.addf %35, %36 : vector<8x128xf32>
    %38 = vector.extract_strided_slice %34 {offsets = [0, 128], sizes = [8, 128], strides = [1, 1]} : vector<8x256xf32> to vector<8x128xf32>
    %39 = arith.negf %37 : vector<8x128xf32>
    %40 = math.exp %39 : vector<8x128xf32>
    %cst_21 = arith.constant 1.000000e+00 : f32
    %41 = vector.broadcast %cst_21 : f32 to vector<8x128xf32>
    %42 = arith.addf %41, %40 : vector<8x128xf32>
    %43 = arith.divf %41, %42 : vector<8x128xf32>
    %44 = vector.extract_strided_slice %43 {offsets = [0, 64], sizes = [8, 32], strides = [1, 1]} : vector<8x128xf32> to vector<8x32xf32>
    %cst_22 = arith.constant 2.000000e+00 : f32
    %45 = vector.broadcast %cst_22 : f32 to vector<8x32xf32>
    %46 = arith.mulf %45, %44 : vector<8x32xf32>
    %cst_23 = arith.constant 1.000000e+00 : f32
    %47 = vector.broadcast %cst_23 : f32 to vector<8x32xf32>
    %48 = arith.subf %46, %47 : vector<8x32xf32>
    %49 = vector.extract_strided_slice %43 {offsets = [0, 32], sizes = [8, 32], strides = [1, 1]} : vector<8x128xf32> to vector<8x32xf32>
    %50 = arith.mulf %49, %10 : vector<8x32xf32>
    %51 = vector.extract_strided_slice %43 {offsets = [0, 0], sizes = [8, 32], strides = [1, 1]} : vector<8x128xf32> to vector<8x32xf32>
    %52 = arith.mulf %51, %48 : vector<8x32xf32>
    %53 = arith.addf %50, %52 : vector<8x32xf32>
    %54 = vector.extract_strided_slice %43 {offsets = [0, 96], sizes = [8, 32], strides = [1, 1]} : vector<8x128xf32> to vector<8x32xf32>
    %55 = math.tanh %53 : vector<8x32xf32>
    %56 = arith.mulf %54, %55 : vector<8x32xf32>
    %c0_24 = arith.constant 0 : index
    %c0_25 = arith.constant 0 : index
    %c0_26 = arith.constant 0 : index
    %57 = vector.load %arg11[%c0_24, %c0_25, %c0_26] : memref<8x8x32xf32, #tpu.memory_space<vmem>>, vector<1x8x32xf32>
    %58 = vector.shape_cast %57 : vector<1x8x32xf32> to vector<8x32xf32>
    %59 = vector.shape_cast %56 : vector<8x32xf32> to vector<1x8x32xf32>
    tpu.vector_store %arg11[%c0_24, %c0_25, %c0_26], %59 {strides = array<i32>} : memref<8x8x32xf32, #tpu.memory_space<vmem>>, vector<1x8x32xf32>,
    %c8 = arith.constant 8 : index
    %c0_27 = arith.constant 0 : index
    %60 = vector.load %arg10[%c8, %c0_27] : memref<64x128xf32, #tpu.memory_space<vmem>>, vector<8x128xf32>
    %61 = arith.addf %60, %38 : vector<8x128xf32>
    %62 = arith.negf %61 : vector<8x128xf32>
    %63 = math.exp %62 : vector<8x128xf32>
    %cst_28 = arith.constant 1.000000e+00 : f32
    %64 = vector.broadcast %cst_28 : f32 to vector<8x128xf32>
    %65 = arith.addf %64, %63 : vector<8x128xf32>
    %66 = arith.divf %64, %65 : vector<8x128xf32>
    %67 = vector.extract_strided_slice %66 {offsets = [0, 64], sizes = [8, 32], strides = [1, 1]} : vector<8x128xf32> to vector<8x32xf32>
    %cst_29 = arith.constant 2.000000e+00 : f32
    %68 = vector.broadcast %cst_29 : f32 to vector<8x32xf32>
    %69 = arith.mulf %68, %67 : vector<8x32xf32>
    %cst_30 = arith.constant 1.000000e+00 : f32
    %70 = vector.broadcast %cst_30 : f32 to vector<8x32xf32>
    %71 = arith.subf %69, %70 : vector<8x32xf32>
    %72 = vector.extract_strided_slice %66 {offsets = [0, 32], sizes = [8, 32], strides = [1, 1]} : vector<8x128xf32> to vector<8x32xf32>
    %73 = arith.mulf %72, %28 : vector<8x32xf32>
    %74 = vector.extract_strided_slice %66 {offsets = [0, 0], sizes = [8, 32], strides = [1, 1]} : vector<8x128xf32> to vector<8x32xf32>
    %75 = arith.mulf %74, %71 : vector<8x32xf32>
    %76 = arith.addf %73, %75 : vector<8x32xf32>
    %77 = vector.extract_strided_slice %66 {offsets = [0, 96], sizes = [8, 32], strides = [1, 1]} : vector<8x128xf32> to vector<8x32xf32>
    %78 = math.tanh %76 : vector<8x32xf32>
    %79 = arith.mulf %77, %78 : vector<8x32xf32>
    %80 = tpu.concatenate %79, %56 in 1 : vector<8x32xf32>, vector<8x32xf32> -> vector<8x64xf32>
    %c0_31 = arith.constant 0 : index
    %c0_32 = arith.constant 0 : index
    %81 = vector.load %arg3[%c0_31, %c0_32] : memref<64x256xf32, #tpu.memory_space<vmem>>, vector<64x256xf32>
    %cst_33 = arith.constant dense<0.000000e+00> : vector<8x256xf32>
    %82 = tpu.matmul %80, %81, %cst_33 {dimension_numbers = #tpu.dot_dimension_numbers<[1], [0], [0], [1], [0, 0, 1, 1], [], []>} : vector<8x64xf32>, vector<64x256xf32>, vector<8x256xf32> -> vector<8x256xf32>
    %83 = vector.extract_strided_slice %82 {offsets = [0, 0], sizes = [8, 128], strides = [1, 1]} : vector<8x256xf32> to vector<8x128xf32>
    %84 = vector.broadcast %7 : vector<1x128xf32> to vector<8x128xf32>
    %85 = arith.addf %83, %84 : vector<8x128xf32>
    %86 = vector.extract_strided_slice %82 {offsets = [0, 128], sizes = [8, 128], strides = [1, 1]} : vector<8x256xf32> to vector<8x128xf32>
    %87 = arith.negf %85 : vector<8x128xf32>
    %88 = math.exp %87 : vector<8x128xf32>
    %cst_34 = arith.constant 1.000000e+00 : f32
    %89 = vector.broadcast %cst_34 : f32 to vector<8x128xf32>
    %90 = arith.addf %89, %88 : vector<8x128xf32>
    %91 = arith.divf %89, %90 : vector<8x128xf32>
    %92 = vector.extract_strided_slice %91 {offsets = [0, 64], sizes = [8, 32], strides = [1, 1]} : vector<8x128xf32> to vector<8x32xf32>
    %cst_35 = arith.constant 2.000000e+00 : f32
    %93 = vector.broadcast %cst_35 : f32 to vector<8x32xf32>
    %94 = arith.mulf %93, %92 : vector<8x32xf32>
    %cst_36 = arith.constant 1.000000e+00 : f32
    %95 = vector.broadcast %cst_36 : f32 to vector<8x32xf32>
    %96 = arith.subf %94, %95 : vector<8x32xf32>
    %97 = vector.extract_strided_slice %91 {offsets = [0, 32], sizes = [8, 32], strides = [1, 1]} : vector<8x128xf32> to vector<8x32xf32>
    %98 = arith.mulf %97, %53 : vector<8x32xf32>
    %99 = vector.extract_strided_slice %91 {offsets = [0, 0], sizes = [8, 32], strides = [1, 1]} : vector<8x128xf32> to vector<8x32xf32>
    %100 = arith.mulf %99, %96 : vector<8x32xf32>
    %101 = arith.addf %98, %100 : vector<8x32xf32>
    %102 = vector.extract_strided_slice %91 {offsets = [0, 96], sizes = [8, 32], strides = [1, 1]} : vector<8x128xf32> to vector<8x32xf32>
    %103 = math.tanh %101 : vector<8x32xf32>
    %104 = arith.mulf %102, %103 : vector<8x32xf32>
    %c1 = arith.constant 1 : index
    %c0_37 = arith.constant 0 : index
    %c0_38 = arith.constant 0 : index
    %105 = vector.load %arg11[%c1, %c0_37, %c0_38] : memref<8x8x32xf32, #tpu.memory_space<vmem>>, vector<1x8x32xf32>
    %106 = vector.shape_cast %105 : vector<1x8x32xf32> to vector<8x32xf32>
    %107 = vector.shape_cast %104 : vector<8x32xf32> to vector<1x8x32xf32>
    tpu.vector_store %arg11[%c1, %c0_37, %c0_38], %107 {strides = array<i32>} : memref<8x8x32xf32, #tpu.memory_space<vmem>>, vector<1x8x32xf32>,
    %c16 = arith.constant 16 : index
    %c0_39 = arith.constant 0 : index
    %108 = vector.load %arg10[%c16, %c0_39] : memref<64x128xf32, #tpu.memory_space<vmem>>, vector<8x128xf32>
    %109 = arith.addf %108, %86 : vector<8x128xf32>
    %110 = arith.negf %109 : vector<8x128xf32>
    %111 = math.exp %110 : vector<8x128xf32>
    %cst_40 = arith.constant 1.000000e+00 : f32
    %112 = vector.broadcast %cst_40 : f32 to vector<8x128xf32>
    %113 = arith.addf %112, %111 : vector<8x128xf32>
    %114 = arith.divf %112, %113 : vector<8x128xf32>
    %115 = vector.extract_strided_slice %114 {offsets = [0, 64], sizes = [8, 32], strides = [1, 1]} : vector<8x128xf32> to vector<8x32xf32>
    %cst_41 = arith.constant 2.000000e+00 : f32
    %116 = vector.broadcast %cst_41 : f32 to vector<8x32xf32>
    %117 = arith.mulf %116, %115 : vector<8x32xf32>
    %cst_42 = arith.constant 1.000000e+00 : f32
    %118 = vector.broadcast %cst_42 : f32 to vector<8x32xf32>
    %119 = arith.subf %117, %118 : vector<8x32xf32>
    %120 = vector.extract_strided_slice %114 {offsets = [0, 32], sizes = [8, 32], strides = [1, 1]} : vector<8x128xf32> to vector<8x32xf32>
    %121 = arith.mulf %120, %76 : vector<8x32xf32>
    %122 = vector.extract_strided_slice %114 {offsets = [0, 0], sizes = [8, 32], strides = [1, 1]} : vector<8x128xf32> to vector<8x32xf32>
    %123 = arith.mulf %122, %119 : vector<8x32xf32>
    %124 = arith.addf %121, %123 : vector<8x32xf32>
    %125 = vector.extract_strided_slice %114 {offsets = [0, 96], sizes = [8, 32], strides = [1, 1]} : vector<8x128xf32> to vector<8x32xf32>
    %126 = math.tanh %124 : vector<8x32xf32>
    %127 = arith.mulf %125, %126 : vector<8x32xf32>
    %128 = tpu.concatenate %127, %104 in 1 : vector<8x32xf32>, vector<8x32xf32> -> vector<8x64xf32>
    %c0_43 = arith.constant 0 : index
    %c0_44 = arith.constant 0 : index
    %129 = vector.load %arg3[%c0_43, %c0_44] : memref<64x256xf32, #tpu.memory_space<vmem>>, vector<64x256xf32>
    %cst_45 = arith.constant dense<0.000000e+00> : vector<8x256xf32>
    %130 = tpu.matmul %128, %129, %cst_45 {dimension_numbers = #tpu.dot_dimension_numbers<[1], [0], [0], [1], [0, 0, 1, 1], [], []>} : vector<8x64xf32>, vector<64x256xf32>, vector<8x256xf32> -> vector<8x256xf32>
    %131 = vector.extract_strided_slice %130 {offsets = [0, 0], sizes = [8, 128], strides = [1, 1]} : vector<8x256xf32> to vector<8x128xf32>
    %132 = vector.broadcast %7 : vector<1x128xf32> to vector<8x128xf32>
    %133 = arith.addf %131, %132 : vector<8x128xf32>
    %134 = vector.extract_strided_slice %130 {offsets = [0, 128], sizes = [8, 128], strides = [1, 1]} : vector<8x256xf32> to vector<8x128xf32>
    %135 = arith.negf %133 : vector<8x128xf32>
    %136 = math.exp %135 : vector<8x128xf32>
    %cst_46 = arith.constant 1.000000e+00 : f32
    %137 = vector.broadcast %cst_46 : f32 to vector<8x128xf32>
    %138 = arith.addf %137, %136 : vector<8x128xf32>
    %139 = arith.divf %137, %138 : vector<8x128xf32>
    %140 = vector.extract_strided_slice %139 {offsets = [0, 64], sizes = [8, 32], strides = [1, 1]} : vector<8x128xf32> to vector<8x32xf32>
    %cst_47 = arith.constant 2.000000e+00 : f32
    %141 = vector.broadcast %cst_47 : f32 to vector<8x32xf32>
    %142 = arith.mulf %141, %140 : vector<8x32xf32>
    %cst_48 = arith.constant 1.000000e+00 : f32
    %143 = vector.broadcast %cst_48 : f32 to vector<8x32xf32>
    %144 = arith.subf %142, %143 : vector<8x32xf32>
    %145 = vector.extract_strided_slice %139 {offsets = [0, 32], sizes = [8, 32], strides = [1, 1]} : vector<8x128xf32> to vector<8x32xf32>
    %146 = arith.mulf %145, %101 : vector<8x32xf32>
    %147 = vector.extract_strided_slice %139 {offsets = [0, 0], sizes = [8, 32], strides = [1, 1]} : vector<8x128xf32> to vector<8x32xf32>
    %148 = arith.mulf %147, %144 : vector<8x32xf32>
    %149 = arith.addf %146, %148 : vector<8x32xf32>
    %150 = vector.extract_strided_slice %139 {offsets = [0, 96], sizes = [8, 32], strides = [1, 1]} : vector<8x128xf32> to vector<8x32xf32>
    %151 = math.tanh %149 : vector<8x32xf32>
    %152 = arith.mulf %150, %151 : vector<8x32xf32>
    %c2 = arith.constant 2 : index
    %c0_49 = arith.constant 0 : index
    %c0_50 = arith.constant 0 : index
    %153 = vector.load %arg11[%c2, %c0_49, %c0_50] : memref<8x8x32xf32, #tpu.memory_space<vmem>>, vector<1x8x32xf32>
    %154 = vector.shape_cast %153 : vector<1x8x32xf32> to vector<8x32xf32>
    %155 = vector.shape_cast %152 : vector<8x32xf32> to vector<1x8x32xf32>
    tpu.vector_store %arg11[%c2, %c0_49, %c0_50], %155 {strides = array<i32>} : memref<8x8x32xf32, #tpu.memory_space<vmem>>, vector<1x8x32xf32>,
    %c24 = arith.constant 24 : index
    %c0_51 = arith.constant 0 : index
    %156 = vector.load %arg10[%c24, %c0_51] : memref<64x128xf32, #tpu.memory_space<vmem>>, vector<8x128xf32>
    %157 = arith.addf %156, %134 : vector<8x128xf32>
    %158 = arith.negf %157 : vector<8x128xf32>
    %159 = math.exp %158 : vector<8x128xf32>
    %cst_52 = arith.constant 1.000000e+00 : f32
    %160 = vector.broadcast %cst_52 : f32 to vector<8x128xf32>
    %161 = arith.addf %160, %159 : vector<8x128xf32>
    %162 = arith.divf %160, %161 : vector<8x128xf32>
    %163 = vector.extract_strided_slice %162 {offsets = [0, 64], sizes = [8, 32], strides = [1, 1]} : vector<8x128xf32> to vector<8x32xf32>
    %cst_53 = arith.constant 2.000000e+00 : f32
    %164 = vector.broadcast %cst_53 : f32 to vector<8x32xf32>
    %165 = arith.mulf %164, %163 : vector<8x32xf32>
    %cst_54 = arith.constant 1.000000e+00 : f32
    %166 = vector.broadcast %cst_54 : f32 to vector<8x32xf32>
    %167 = arith.subf %165, %166 : vector<8x32xf32>
    %168 = vector.extract_strided_slice %162 {offsets = [0, 32], sizes = [8, 32], strides = [1, 1]} : vector<8x128xf32> to vector<8x32xf32>
    %169 = arith.mulf %168, %124 : vector<8x32xf32>
    %170 = vector.extract_strided_slice %162 {offsets = [0, 0], sizes = [8, 32], strides = [1, 1]} : vector<8x128xf32> to vector<8x32xf32>
    %171 = arith.mulf %170, %167 : vector<8x32xf32>
    %172 = arith.addf %169, %171 : vector<8x32xf32>
    %173 = vector.extract_strided_slice %162 {offsets = [0, 96], sizes = [8, 32], strides = [1, 1]} : vector<8x128xf32> to vector<8x32xf32>
    %174 = math.tanh %172 : vector<8x32xf32>
    %175 = arith.mulf %173, %174 : vector<8x32xf32>
    %176 = tpu.concatenate %175, %152 in 1 : vector<8x32xf32>, vector<8x32xf32> -> vector<8x64xf32>
    %c0_55 = arith.constant 0 : index
    %c0_56 = arith.constant 0 : index
    %177 = vector.load %arg3[%c0_55, %c0_56] : memref<64x256xf32, #tpu.memory_space<vmem>>, vector<64x256xf32>
    %cst_57 = arith.constant dense<0.000000e+00> : vector<8x256xf32>
    %178 = tpu.matmul %176, %177, %cst_57 {dimension_numbers = #tpu.dot_dimension_numbers<[1], [0], [0], [1], [0, 0, 1, 1], [], []>} : vector<8x64xf32>, vector<64x256xf32>, vector<8x256xf32> -> vector<8x256xf32>
    %179 = vector.extract_strided_slice %178 {offsets = [0, 0], sizes = [8, 128], strides = [1, 1]} : vector<8x256xf32> to vector<8x128xf32>
    %180 = vector.broadcast %7 : vector<1x128xf32> to vector<8x128xf32>
    %181 = arith.addf %179, %180 : vector<8x128xf32>
    %182 = vector.extract_strided_slice %178 {offsets = [0, 128], sizes = [8, 128], strides = [1, 1]} : vector<8x256xf32> to vector<8x128xf32>
    %183 = arith.negf %181 : vector<8x128xf32>
    %184 = math.exp %183 : vector<8x128xf32>
    %cst_58 = arith.constant 1.000000e+00 : f32
    %185 = vector.broadcast %cst_58 : f32 to vector<8x128xf32>
    %186 = arith.addf %185, %184 : vector<8x128xf32>
    %187 = arith.divf %185, %186 : vector<8x128xf32>
    %188 = vector.extract_strided_slice %187 {offsets = [0, 64], sizes = [8, 32], strides = [1, 1]} : vector<8x128xf32> to vector<8x32xf32>
    %cst_59 = arith.constant 2.000000e+00 : f32
    %189 = vector.broadcast %cst_59 : f32 to vector<8x32xf32>
    %190 = arith.mulf %189, %188 : vector<8x32xf32>
    %cst_60 = arith.constant 1.000000e+00 : f32
    %191 = vector.broadcast %cst_60 : f32 to vector<8x32xf32>
    %192 = arith.subf %190, %191 : vector<8x32xf32>
    %193 = vector.extract_strided_slice %187 {offsets = [0, 32], sizes = [8, 32], strides = [1, 1]} : vector<8x128xf32> to vector<8x32xf32>
    %194 = arith.mulf %193, %149 : vector<8x32xf32>
    %195 = vector.extract_strided_slice %187 {offsets = [0, 0], sizes = [8, 32], strides = [1, 1]} : vector<8x128xf32> to vector<8x32xf32>
    %196 = arith.mulf %195, %192 : vector<8x32xf32>
    %197 = arith.addf %194, %196 : vector<8x32xf32>
    %198 = vector.extract_strided_slice %187 {offsets = [0, 96], sizes = [8, 32], strides = [1, 1]} : vector<8x128xf32> to vector<8x32xf32>
    %199 = math.tanh %197 : vector<8x32xf32>
    %200 = arith.mulf %198, %199 : vector<8x32xf32>
    %c3 = arith.constant 3 : index
    %c0_61 = arith.constant 0 : index
    %c0_62 = arith.constant 0 : index
    %201 = vector.load %arg11[%c3, %c0_61, %c0_62] : memref<8x8x32xf32, #tpu.memory_space<vmem>>, vector<1x8x32xf32>
    %202 = vector.shape_cast %201 : vector<1x8x32xf32> to vector<8x32xf32>
    %203 = vector.shape_cast %200 : vector<8x32xf32> to vector<1x8x32xf32>
    tpu.vector_store %arg11[%c3, %c0_61, %c0_62], %203 {strides = array<i32>} : memref<8x8x32xf32, #tpu.memory_space<vmem>>, vector<1x8x32xf32>,
    %c32 = arith.constant 32 : index
    %c0_63 = arith.constant 0 : index
    %204 = vector.load %arg10[%c32, %c0_63] : memref<64x128xf32, #tpu.memory_space<vmem>>, vector<8x128xf32>
    %205 = arith.addf %204, %182 : vector<8x128xf32>
    %206 = arith.negf %205 : vector<8x128xf32>
    %207 = math.exp %206 : vector<8x128xf32>
    %cst_64 = arith.constant 1.000000e+00 : f32
    %208 = vector.broadcast %cst_64 : f32 to vector<8x128xf32>
    %209 = arith.addf %208, %207 : vector<8x128xf32>
    %210 = arith.divf %208, %209 : vector<8x128xf32>
    %211 = vector.extract_strided_slice %210 {offsets = [0, 64], sizes = [8, 32], strides = [1, 1]} : vector<8x128xf32> to vector<8x32xf32>
    %cst_65 = arith.constant 2.000000e+00 : f32
    %212 = vector.broadcast %cst_65 : f32 to vector<8x32xf32>
    %213 = arith.mulf %212, %211 : vector<8x32xf32>
    %cst_66 = arith.constant 1.000000e+00 : f32
    %214 = vector.broadcast %cst_66 : f32 to vector<8x32xf32>
    %215 = arith.subf %213, %214 : vector<8x32xf32>
    %216 = vector.extract_strided_slice %210 {offsets = [0, 32], sizes = [8, 32], strides = [1, 1]} : vector<8x128xf32> to vector<8x32xf32>
    %217 = arith.mulf %216, %172 : vector<8x32xf32>
    %218 = vector.extract_strided_slice %210 {offsets = [0, 0], sizes = [8, 32], strides = [1, 1]} : vector<8x128xf32> to vector<8x32xf32>
    %219 = arith.mulf %218, %215 : vector<8x32xf32>
    %220 = arith.addf %217, %219 : vector<8x32xf32>
    %221 = vector.extract_strided_slice %210 {offsets = [0, 96], sizes = [8, 32], strides = [1, 1]} : vector<8x128xf32> to vector<8x32xf32>
    %222 = math.tanh %220 : vector<8x32xf32>
    %223 = arith.mulf %221, %222 : vector<8x32xf32>
    %224 = tpu.concatenate %223, %200 in 1 : vector<8x32xf32>, vector<8x32xf32> -> vector<8x64xf32>
    %c0_67 = arith.constant 0 : index
    %c0_68 = arith.constant 0 : index
    %225 = vector.load %arg3[%c0_67, %c0_68] : memref<64x256xf32, #tpu.memory_space<vmem>>, vector<64x256xf32>
    %cst_69 = arith.constant dense<0.000000e+00> : vector<8x256xf32>
    %226 = tpu.matmul %224, %225, %cst_69 {dimension_numbers = #tpu.dot_dimension_numbers<[1], [0], [0], [1], [0, 0, 1, 1], [], []>} : vector<8x64xf32>, vector<64x256xf32>, vector<8x256xf32> -> vector<8x256xf32>
    %227 = vector.extract_strided_slice %226 {offsets = [0, 0], sizes = [8, 128], strides = [1, 1]} : vector<8x256xf32> to vector<8x128xf32>
    %228 = vector.broadcast %7 : vector<1x128xf32> to vector<8x128xf32>
    %229 = arith.addf %227, %228 : vector<8x128xf32>
    %230 = vector.extract_strided_slice %226 {offsets = [0, 128], sizes = [8, 128], strides = [1, 1]} : vector<8x256xf32> to vector<8x128xf32>
    %231 = arith.negf %229 : vector<8x128xf32>
    %232 = math.exp %231 : vector<8x128xf32>
    %cst_70 = arith.constant 1.000000e+00 : f32
    %233 = vector.broadcast %cst_70 : f32 to vector<8x128xf32>
    %234 = arith.addf %233, %232 : vector<8x128xf32>
    %235 = arith.divf %233, %234 : vector<8x128xf32>
    %236 = vector.extract_strided_slice %235 {offsets = [0, 64], sizes = [8, 32], strides = [1, 1]} : vector<8x128xf32> to vector<8x32xf32>
    %cst_71 = arith.constant 2.000000e+00 : f32
    %237 = vector.broadcast %cst_71 : f32 to vector<8x32xf32>
    %238 = arith.mulf %237, %236 : vector<8x32xf32>
    %cst_72 = arith.constant 1.000000e+00 : f32
    %239 = vector.broadcast %cst_72 : f32 to vector<8x32xf32>
    %240 = arith.subf %238, %239 : vector<8x32xf32>
    %241 = vector.extract_strided_slice %235 {offsets = [0, 32], sizes = [8, 32], strides = [1, 1]} : vector<8x128xf32> to vector<8x32xf32>
    %242 = arith.mulf %241, %197 : vector<8x32xf32>
    %243 = vector.extract_strided_slice %235 {offsets = [0, 0], sizes = [8, 32], strides = [1, 1]} : vector<8x128xf32> to vector<8x32xf32>
    %244 = arith.mulf %243, %240 : vector<8x32xf32>
    %245 = arith.addf %242, %244 : vector<8x32xf32>
    %246 = vector.extract_strided_slice %235 {offsets = [0, 96], sizes = [8, 32], strides = [1, 1]} : vector<8x128xf32> to vector<8x32xf32>
    %247 = math.tanh %245 : vector<8x32xf32>
    %248 = arith.mulf %246, %247 : vector<8x32xf32>
    %c4 = arith.constant 4 : index
    %c0_73 = arith.constant 0 : index
    %c0_74 = arith.constant 0 : index
    %249 = vector.load %arg11[%c4, %c0_73, %c0_74] : memref<8x8x32xf32, #tpu.memory_space<vmem>>, vector<1x8x32xf32>
    %250 = vector.shape_cast %249 : vector<1x8x32xf32> to vector<8x32xf32>
    %251 = vector.shape_cast %248 : vector<8x32xf32> to vector<1x8x32xf32>
    tpu.vector_store %arg11[%c4, %c0_73, %c0_74], %251 {strides = array<i32>} : memref<8x8x32xf32, #tpu.memory_space<vmem>>, vector<1x8x32xf32>,
    %c40 = arith.constant 40 : index
    %c0_75 = arith.constant 0 : index
    %252 = vector.load %arg10[%c40, %c0_75] : memref<64x128xf32, #tpu.memory_space<vmem>>, vector<8x128xf32>
    %253 = arith.addf %252, %230 : vector<8x128xf32>
    %254 = arith.negf %253 : vector<8x128xf32>
    %255 = math.exp %254 : vector<8x128xf32>
    %cst_76 = arith.constant 1.000000e+00 : f32
    %256 = vector.broadcast %cst_76 : f32 to vector<8x128xf32>
    %257 = arith.addf %256, %255 : vector<8x128xf32>
    %258 = arith.divf %256, %257 : vector<8x128xf32>
    %259 = vector.extract_strided_slice %258 {offsets = [0, 64], sizes = [8, 32], strides = [1, 1]} : vector<8x128xf32> to vector<8x32xf32>
    %cst_77 = arith.constant 2.000000e+00 : f32
    %260 = vector.broadcast %cst_77 : f32 to vector<8x32xf32>
    %261 = arith.mulf %260, %259 : vector<8x32xf32>
    %cst_78 = arith.constant 1.000000e+00 : f32
    %262 = vector.broadcast %cst_78 : f32 to vector<8x32xf32>
    %263 = arith.subf %261, %262 : vector<8x32xf32>
    %264 = vector.extract_strided_slice %258 {offsets = [0, 32], sizes = [8, 32], strides = [1, 1]} : vector<8x128xf32> to vector<8x32xf32>
    %265 = arith.mulf %264, %220 : vector<8x32xf32>
    %266 = vector.extract_strided_slice %258 {offsets = [0, 0], sizes = [8, 32], strides = [1, 1]} : vector<8x128xf32> to vector<8x32xf32>
    %267 = arith.mulf %266, %263 : vector<8x32xf32>
    %268 = arith.addf %265, %267 : vector<8x32xf32>
    %269 = vector.extract_strided_slice %258 {offsets = [0, 96], sizes = [8, 32], strides = [1, 1]} : vector<8x128xf32> to vector<8x32xf32>
    %270 = math.tanh %268 : vector<8x32xf32>
    %271 = arith.mulf %269, %270 : vector<8x32xf32>
    %272 = tpu.concatenate %271, %248 in 1 : vector<8x32xf32>, vector<8x32xf32> -> vector<8x64xf32>
    %c0_79 = arith.constant 0 : index
    %c0_80 = arith.constant 0 : index
    %273 = vector.load %arg3[%c0_79, %c0_80] : memref<64x256xf32, #tpu.memory_space<vmem>>, vector<64x256xf32>
    %cst_81 = arith.constant dense<0.000000e+00> : vector<8x256xf32>
    %274 = tpu.matmul %272, %273, %cst_81 {dimension_numbers = #tpu.dot_dimension_numbers<[1], [0], [0], [1], [0, 0, 1, 1], [], []>} : vector<8x64xf32>, vector<64x256xf32>, vector<8x256xf32> -> vector<8x256xf32>
    %275 = vector.extract_strided_slice %274 {offsets = [0, 0], sizes = [8, 128], strides = [1, 1]} : vector<8x256xf32> to vector<8x128xf32>
    %276 = vector.broadcast %7 : vector<1x128xf32> to vector<8x128xf32>
    %277 = arith.addf %275, %276 : vector<8x128xf32>
    %278 = vector.extract_strided_slice %274 {offsets = [0, 128], sizes = [8, 128], strides = [1, 1]} : vector<8x256xf32> to vector<8x128xf32>
    %279 = arith.negf %277 : vector<8x128xf32>
    %280 = math.exp %279 : vector<8x128xf32>
    %cst_82 = arith.constant 1.000000e+00 : f32
    %281 = vector.broadcast %cst_82 : f32 to vector<8x128xf32>
    %282 = arith.addf %281, %280 : vector<8x128xf32>
    %283 = arith.divf %281, %282 : vector<8x128xf32>
    %284 = vector.extract_strided_slice %283 {offsets = [0, 64], sizes = [8, 32], strides = [1, 1]} : vector<8x128xf32> to vector<8x32xf32>
    %cst_83 = arith.constant 2.000000e+00 : f32
    %285 = vector.broadcast %cst_83 : f32 to vector<8x32xf32>
    %286 = arith.mulf %285, %284 : vector<8x32xf32>
    %cst_84 = arith.constant 1.000000e+00 : f32
    %287 = vector.broadcast %cst_84 : f32 to vector<8x32xf32>
    %288 = arith.subf %286, %287 : vector<8x32xf32>
    %289 = vector.extract_strided_slice %283 {offsets = [0, 32], sizes = [8, 32], strides = [1, 1]} : vector<8x128xf32> to vector<8x32xf32>
    %290 = arith.mulf %289, %245 : vector<8x32xf32>
    %291 = vector.extract_strided_slice %283 {offsets = [0, 0], sizes = [8, 32], strides = [1, 1]} : vector<8x128xf32> to vector<8x32xf32>
    %292 = arith.mulf %291, %288 : vector<8x32xf32>
    %293 = arith.addf %290, %292 : vector<8x32xf32>
    %294 = vector.extract_strided_slice %283 {offsets = [0, 96], sizes = [8, 32], strides = [1, 1]} : vector<8x128xf32> to vector<8x32xf32>
    %295 = math.tanh %293 : vector<8x32xf32>
    %296 = arith.mulf %294, %295 : vector<8x32xf32>
    %c5 = arith.constant 5 : index
    %c0_85 = arith.constant 0 : index
    %c0_86 = arith.constant 0 : index
    %297 = vector.load %arg11[%c5, %c0_85, %c0_86] : memref<8x8x32xf32, #tpu.memory_space<vmem>>, vector<1x8x32xf32>
    %298 = vector.shape_cast %297 : vector<1x8x32xf32> to vector<8x32xf32>
    %299 = vector.shape_cast %296 : vector<8x32xf32> to vector<1x8x32xf32>
    tpu.vector_store %arg11[%c5, %c0_85, %c0_86], %299 {strides = array<i32>} : memref<8x8x32xf32, #tpu.memory_space<vmem>>, vector<1x8x32xf32>,
    %c48 = arith.constant 48 : index
    %c0_87 = arith.constant 0 : index
    %300 = vector.load %arg10[%c48, %c0_87] : memref<64x128xf32, #tpu.memory_space<vmem>>, vector<8x128xf32>
    %301 = arith.addf %300, %278 : vector<8x128xf32>
    %302 = arith.negf %301 : vector<8x128xf32>
    %303 = math.exp %302 : vector<8x128xf32>
    %cst_88 = arith.constant 1.000000e+00 : f32
    %304 = vector.broadcast %cst_88 : f32 to vector<8x128xf32>
    %305 = arith.addf %304, %303 : vector<8x128xf32>
    %306 = arith.divf %304, %305 : vector<8x128xf32>
    %307 = vector.extract_strided_slice %306 {offsets = [0, 64], sizes = [8, 32], strides = [1, 1]} : vector<8x128xf32> to vector<8x32xf32>
    %cst_89 = arith.constant 2.000000e+00 : f32
    %308 = vector.broadcast %cst_89 : f32 to vector<8x32xf32>
    %309 = arith.mulf %308, %307 : vector<8x32xf32>
    %cst_90 = arith.constant 1.000000e+00 : f32
    %310 = vector.broadcast %cst_90 : f32 to vector<8x32xf32>
    %311 = arith.subf %309, %310 : vector<8x32xf32>
    %312 = vector.extract_strided_slice %306 {offsets = [0, 32], sizes = [8, 32], strides = [1, 1]} : vector<8x128xf32> to vector<8x32xf32>
    %313 = arith.mulf %312, %268 : vector<8x32xf32>
    %314 = vector.extract_strided_slice %306 {offsets = [0, 0], sizes = [8, 32], strides = [1, 1]} : vector<8x128xf32> to vector<8x32xf32>
    %315 = arith.mulf %314, %311 : vector<8x32xf32>
    %316 = arith.addf %313, %315 : vector<8x32xf32>
    %317 = vector.extract_strided_slice %306 {offsets = [0, 96], sizes = [8, 32], strides = [1, 1]} : vector<8x128xf32> to vector<8x32xf32>
    %318 = math.tanh %316 : vector<8x32xf32>
    %319 = arith.mulf %317, %318 : vector<8x32xf32>
    %320 = tpu.concatenate %319, %296 in 1 : vector<8x32xf32>, vector<8x32xf32> -> vector<8x64xf32>
    %c0_91 = arith.constant 0 : index
    %c0_92 = arith.constant 0 : index
    %321 = vector.load %arg3[%c0_91, %c0_92] : memref<64x256xf32, #tpu.memory_space<vmem>>, vector<64x256xf32>
    %cst_93 = arith.constant dense<0.000000e+00> : vector<8x256xf32>
    %322 = tpu.matmul %320, %321, %cst_93 {dimension_numbers = #tpu.dot_dimension_numbers<[1], [0], [0], [1], [0, 0, 1, 1], [], []>} : vector<8x64xf32>, vector<64x256xf32>, vector<8x256xf32> -> vector<8x256xf32>
    %323 = vector.extract_strided_slice %322 {offsets = [0, 0], sizes = [8, 128], strides = [1, 1]} : vector<8x256xf32> to vector<8x128xf32>
    %324 = vector.broadcast %7 : vector<1x128xf32> to vector<8x128xf32>
    %325 = arith.addf %323, %324 : vector<8x128xf32>
    %326 = vector.extract_strided_slice %322 {offsets = [0, 128], sizes = [8, 128], strides = [1, 1]} : vector<8x256xf32> to vector<8x128xf32>
    %327 = arith.negf %325 : vector<8x128xf32>
    %328 = math.exp %327 : vector<8x128xf32>
    %cst_94 = arith.constant 1.000000e+00 : f32
    %329 = vector.broadcast %cst_94 : f32 to vector<8x128xf32>
    %330 = arith.addf %329, %328 : vector<8x128xf32>
    %331 = arith.divf %329, %330 : vector<8x128xf32>
    %332 = vector.extract_strided_slice %331 {offsets = [0, 64], sizes = [8, 32], strides = [1, 1]} : vector<8x128xf32> to vector<8x32xf32>
    %cst_95 = arith.constant 2.000000e+00 : f32
    %333 = vector.broadcast %cst_95 : f32 to vector<8x32xf32>
    %334 = arith.mulf %333, %332 : vector<8x32xf32>
    %cst_96 = arith.constant 1.000000e+00 : f32
    %335 = vector.broadcast %cst_96 : f32 to vector<8x32xf32>
    %336 = arith.subf %334, %335 : vector<8x32xf32>
    %337 = vector.extract_strided_slice %331 {offsets = [0, 32], sizes = [8, 32], strides = [1, 1]} : vector<8x128xf32> to vector<8x32xf32>
    %338 = arith.mulf %337, %293 : vector<8x32xf32>
    %339 = vector.extract_strided_slice %331 {offsets = [0, 0], sizes = [8, 32], strides = [1, 1]} : vector<8x128xf32> to vector<8x32xf32>
    %340 = arith.mulf %339, %336 : vector<8x32xf32>
    %341 = arith.addf %338, %340 : vector<8x32xf32>
    %342 = vector.extract_strided_slice %331 {offsets = [0, 96], sizes = [8, 32], strides = [1, 1]} : vector<8x128xf32> to vector<8x32xf32>
    %343 = math.tanh %341 : vector<8x32xf32>
    %344 = arith.mulf %342, %343 : vector<8x32xf32>
    %c6 = arith.constant 6 : index
    %c0_97 = arith.constant 0 : index
    %c0_98 = arith.constant 0 : index
    %345 = vector.load %arg11[%c6, %c0_97, %c0_98] : memref<8x8x32xf32, #tpu.memory_space<vmem>>, vector<1x8x32xf32>
    %346 = vector.shape_cast %345 : vector<1x8x32xf32> to vector<8x32xf32>
    %347 = vector.shape_cast %344 : vector<8x32xf32> to vector<1x8x32xf32>
    tpu.vector_store %arg11[%c6, %c0_97, %c0_98], %347 {strides = array<i32>} : memref<8x8x32xf32, #tpu.memory_space<vmem>>, vector<1x8x32xf32>,
    %c56 = arith.constant 56 : index
    %c0_99 = arith.constant 0 : index
    %348 = vector.load %arg10[%c56, %c0_99] : memref<64x128xf32, #tpu.memory_space<vmem>>, vector<8x128xf32>
    %349 = arith.addf %348, %326 : vector<8x128xf32>
    %350 = arith.negf %349 : vector<8x128xf32>
    %351 = math.exp %350 : vector<8x128xf32>
    %cst_100 = arith.constant 1.000000e+00 : f32
    %352 = vector.broadcast %cst_100 : f32 to vector<8x128xf32>
    %353 = arith.addf %352, %351 : vector<8x128xf32>
    %354 = arith.divf %352, %353 : vector<8x128xf32>
    %355 = vector.extract_strided_slice %354 {offsets = [0, 64], sizes = [8, 32], strides = [1, 1]} : vector<8x128xf32> to vector<8x32xf32>
    %cst_101 = arith.constant 2.000000e+00 : f32
    %356 = vector.broadcast %cst_101 : f32 to vector<8x32xf32>
    %357 = arith.mulf %356, %355 : vector<8x32xf32>
    %cst_102 = arith.constant 1.000000e+00 : f32
    %358 = vector.broadcast %cst_102 : f32 to vector<8x32xf32>
    %359 = arith.subf %357, %358 : vector<8x32xf32>
    %360 = vector.extract_strided_slice %354 {offsets = [0, 32], sizes = [8, 32], strides = [1, 1]} : vector<8x128xf32> to vector<8x32xf32>
    %361 = arith.mulf %360, %316 : vector<8x32xf32>
    %362 = vector.extract_strided_slice %354 {offsets = [0, 0], sizes = [8, 32], strides = [1, 1]} : vector<8x128xf32> to vector<8x32xf32>
    %363 = arith.mulf %362, %359 : vector<8x32xf32>
    %364 = arith.addf %361, %363 : vector<8x32xf32>
    %365 = vector.extract_strided_slice %354 {offsets = [0, 96], sizes = [8, 32], strides = [1, 1]} : vector<8x128xf32> to vector<8x32xf32>
    %366 = math.tanh %364 : vector<8x32xf32>
    %367 = arith.mulf %365, %366 : vector<8x32xf32>
    %368 = tpu.concatenate %367, %344 in 1 : vector<8x32xf32>, vector<8x32xf32> -> vector<8x64xf32>
    %c0_103 = arith.constant 0 : index
    %c0_104 = arith.constant 0 : index
    %369 = vector.load %arg3[%c0_103, %c0_104] : memref<64x256xf32, #tpu.memory_space<vmem>>, vector<64x256xf32>
    %cst_105 = arith.constant dense<0.000000e+00> : vector<8x256xf32>
    %370 = tpu.matmul %368, %369, %cst_105 {dimension_numbers = #tpu.dot_dimension_numbers<[1], [0], [0], [1], [0, 0, 1, 1], [], []>} : vector<8x64xf32>, vector<64x256xf32>, vector<8x256xf32> -> vector<8x256xf32>
    %371 = vector.extract_strided_slice %370 {offsets = [0, 0], sizes = [8, 128], strides = [1, 1]} : vector<8x256xf32> to vector<8x128xf32>
    %372 = vector.broadcast %7 : vector<1x128xf32> to vector<8x128xf32>
    %373 = arith.addf %371, %372 : vector<8x128xf32>
    %374 = arith.negf %373 : vector<8x128xf32>
    %375 = math.exp %374 : vector<8x128xf32>
    %cst_106 = arith.constant 1.000000e+00 : f32
    %376 = vector.broadcast %cst_106 : f32 to vector<8x128xf32>
    %377 = arith.addf %376, %375 : vector<8x128xf32>
    %378 = arith.divf %376, %377 : vector<8x128xf32>
    %379 = vector.extract_strided_slice %378 {offsets = [0, 64], sizes = [8, 32], strides = [1, 1]} : vector<8x128xf32> to vector<8x32xf32>
    %cst_107 = arith.constant 2.000000e+00 : f32
    %380 = vector.broadcast %cst_107 : f32 to vector<8x32xf32>
    %381 = arith.mulf %380, %379 : vector<8x32xf32>
    %cst_108 = arith.constant 1.000000e+00 : f32
    %382 = vector.broadcast %cst_108 : f32 to vector<8x32xf32>
    %383 = arith.subf %381, %382 : vector<8x32xf32>
    %384 = vector.extract_strided_slice %378 {offsets = [0, 32], sizes = [8, 32], strides = [1, 1]} : vector<8x128xf32> to vector<8x32xf32>
    %385 = arith.mulf %384, %341 : vector<8x32xf32>
    %386 = vector.extract_strided_slice %378 {offsets = [0, 0], sizes = [8, 32], strides = [1, 1]} : vector<8x128xf32> to vector<8x32xf32>
    %387 = arith.mulf %386, %383 : vector<8x32xf32>
    %388 = arith.addf %385, %387 : vector<8x32xf32>
    %389 = vector.extract_strided_slice %378 {offsets = [0, 96], sizes = [8, 32], strides = [1, 1]} : vector<8x128xf32> to vector<8x32xf32>
    %390 = math.tanh %388 : vector<8x32xf32>
    %391 = arith.mulf %389, %390 : vector<8x32xf32>
    %c7 = arith.constant 7 : index
    %c0_109 = arith.constant 0 : index
    %c0_110 = arith.constant 0 : index
    %392 = vector.load %arg11[%c7, %c0_109, %c0_110] : memref<8x8x32xf32, #tpu.memory_space<vmem>>, vector<1x8x32xf32>
    %393 = vector.shape_cast %392 : vector<1x8x32xf32> to vector<8x32xf32>
    %394 = vector.shape_cast %391 : vector<8x32xf32> to vector<1x8x32xf32>
    tpu.vector_store %arg11[%c7, %c0_109, %c0_110], %394 {strides = array<i32>} : memref<8x8x32xf32, #tpu.memory_space<vmem>>, vector<1x8x32xf32>,
    %c0_111 = arith.constant 0 : index
    %c0_112 = arith.constant 0 : index
    %c0_113 = arith.constant 0 : index
    %395 = vector.load %arg11[%c0_111, %c0_112, %c0_113] : memref<8x8x32xf32, #tpu.memory_space<vmem>>, vector<8x8x32xf32>
    %396 = vector.extract_strided_slice %395 {offsets = [0, 0, 0], sizes = [4, 8, 32], strides = [1, 1, 1]} : vector<8x8x32xf32> to vector<4x8x32xf32>
    %397 = vector.extract_strided_slice %396 {offsets = [0, 0, 0], sizes = [2, 8, 32], strides = [1, 1, 1]} : vector<4x8x32xf32> to vector<2x8x32xf32>
    %398 = vector.extract_strided_slice %397 {offsets = [0, 0, 0], sizes = [1, 8, 32], strides = [1, 1, 1]} : vector<2x8x32xf32> to vector<1x8x32xf32>
    %399 = vector.extract_strided_slice %397 {offsets = [1, 0, 0], sizes = [1, 8, 32], strides = [1, 1, 1]} : vector<2x8x32xf32> to vector<1x8x32xf32>
    %400 = arith.maximumf %398, %399 : vector<1x8x32xf32>
    %401 = vector.extract_strided_slice %396 {offsets = [2, 0, 0], sizes = [2, 8, 32], strides = [1, 1, 1]} : vector<4x8x32xf32> to vector<2x8x32xf32>
    %402 = vector.extract_strided_slice %401 {offsets = [0, 0, 0], sizes = [1, 8, 32], strides = [1, 1, 1]} : vector<2x8x32xf32> to vector<1x8x32xf32>
    %403 = vector.extract_strided_slice %401 {offsets = [1, 0, 0], sizes = [1, 8, 32], strides = [1, 1, 1]} : vector<2x8x32xf32> to vector<1x8x32xf32>
    %404 = arith.maximumf %402, %403 : vector<1x8x32xf32>
    %405 = arith.maximumf %400, %404 : vector<1x8x32xf32>
    %406 = vector.extract_strided_slice %395 {offsets = [4, 0, 0], sizes = [4, 8, 32], strides = [1, 1, 1]} : vector<8x8x32xf32> to vector<4x8x32xf32>
    %407 = vector.extract_strided_slice %406 {offsets = [0, 0, 0], sizes = [2, 8, 32], strides = [1, 1, 1]} : vector<4x8x32xf32> to vector<2x8x32xf32>
    %408 = vector.extract_strided_slice %407 {offsets = [0, 0, 0], sizes = [1, 8, 32], strides = [1, 1, 1]} : vector<2x8x32xf32> to vector<1x8x32xf32>
    %409 = vector.extract_strided_slice %407 {offsets = [1, 0, 0], sizes = [1, 8, 32], strides = [1, 1, 1]} : vector<2x8x32xf32> to vector<1x8x32xf32>
    %410 = arith.maximumf %408, %409 : vector<1x8x32xf32>
    %411 = vector.extract_strided_slice %406 {offsets = [2, 0, 0], sizes = [2, 8, 32], strides = [1, 1, 1]} : vector<4x8x32xf32> to vector<2x8x32xf32>
    %412 = vector.extract_strided_slice %411 {offsets = [0, 0, 0], sizes = [1, 8, 32], strides = [1, 1, 1]} : vector<2x8x32xf32> to vector<1x8x32xf32>
    %413 = vector.extract_strided_slice %411 {offsets = [1, 0, 0], sizes = [1, 8, 32], strides = [1, 1, 1]} : vector<2x8x32xf32> to vector<1x8x32xf32>
    %414 = arith.maximumf %412, %413 : vector<1x8x32xf32>
    %415 = arith.maximumf %410, %414 : vector<1x8x32xf32>
    %416 = arith.maximumf %405, %415 : vector<1x8x32xf32>
    %417 = vector.broadcast %416 : vector<1x8x32xf32> to vector<8x8x32xf32>
    %418 = arith.subf %395, %417 : vector<8x8x32xf32>
    %419 = math.exp %418 : vector<8x8x32xf32>
    %420 = vector.extract_strided_slice %419 {offsets = [0, 0, 0], sizes = [4, 8, 32], strides = [1, 1, 1]} : vector<8x8x32xf32> to vector<4x8x32xf32>
    %421 = vector.extract_strided_slice %420 {offsets = [0, 0, 0], sizes = [2, 8, 32], strides = [1, 1, 1]} : vector<4x8x32xf32> to vector<2x8x32xf32>
    %422 = vector.extract_strided_slice %421 {offsets = [0, 0, 0], sizes = [1, 8, 32], strides = [1, 1, 1]} : vector<2x8x32xf32> to vector<1x8x32xf32>
    %423 = vector.extract_strided_slice %421 {offsets = [1, 0, 0], sizes = [1, 8, 32], strides = [1, 1, 1]} : vector<2x8x32xf32> to vector<1x8x32xf32>
    %424 = arith.addf %422, %423 : vector<1x8x32xf32>
    %425 = vector.extract_strided_slice %420 {offsets = [2, 0, 0], sizes = [2, 8, 32], strides = [1, 1, 1]} : vector<4x8x32xf32> to vector<2x8x32xf32>
    %426 = vector.extract_strided_slice %425 {offsets = [0, 0, 0], sizes = [1, 8, 32], strides = [1, 1, 1]} : vector<2x8x32xf32> to vector<1x8x32xf32>
    %427 = vector.extract_strided_slice %425 {offsets = [1, 0, 0], sizes = [1, 8, 32], strides = [1, 1, 1]} : vector<2x8x32xf32> to vector<1x8x32xf32>
    %428 = arith.addf %426, %427 : vector<1x8x32xf32>
    %429 = arith.addf %424, %428 : vector<1x8x32xf32>
    %430 = vector.extract_strided_slice %419 {offsets = [4, 0, 0], sizes = [4, 8, 32], strides = [1, 1, 1]} : vector<8x8x32xf32> to vector<4x8x32xf32>
    %431 = vector.extract_strided_slice %430 {offsets = [0, 0, 0], sizes = [2, 8, 32], strides = [1, 1, 1]} : vector<4x8x32xf32> to vector<2x8x32xf32>
    %432 = vector.extract_strided_slice %431 {offsets = [0, 0, 0], sizes = [1, 8, 32], strides = [1, 1, 1]} : vector<2x8x32xf32> to vector<1x8x32xf32>
    %433 = vector.extract_strided_slice %431 {offsets = [1, 0, 0], sizes = [1, 8, 32], strides = [1, 1, 1]} : vector<2x8x32xf32> to vector<1x8x32xf32>
    %434 = arith.addf %432, %433 : vector<1x8x32xf32>
    %435 = vector.extract_strided_slice %430 {offsets = [2, 0, 0], sizes = [2, 8, 32], strides = [1, 1, 1]} : vector<4x8x32xf32> to vector<2x8x32xf32>
    %436 = vector.extract_strided_slice %435 {offsets = [0, 0, 0], sizes = [1, 8, 32], strides = [1, 1, 1]} : vector<2x8x32xf32> to vector<1x8x32xf32>
    %437 = vector.extract_strided_slice %435 {offsets = [1, 0, 0], sizes = [1, 8, 32], strides = [1, 1, 1]} : vector<2x8x32xf32> to vector<1x8x32xf32>
    %438 = arith.addf %436, %437 : vector<1x8x32xf32>
    %439 = arith.addf %434, %438 : vector<1x8x32xf32>
    %440 = arith.addf %429, %439 : vector<1x8x32xf32>
    %441 = tpu.reciprocal %440 {approx = true} : vector<1x8x32xf32> -> vector<1x8x32xf32>
    %442 = vector.broadcast %441 : vector<1x8x32xf32> to vector<8x8x32xf32>
    %443 = arith.mulf %419, %442 : vector<8x8x32xf32>
    %444 = vector.shape_cast %443 : vector<8x8x32xf32> to vector<64x32xf32>
    %c0_114 = arith.constant 0 : index
    %c0_115 = arith.constant 0 : index
    %445 = vector.load %arg5[%c0_114, %c0_115] : memref<32x32xf32, #tpu.memory_space<vmem>>, vector<32x32xf32>
    %cst_116 = arith.constant dense<0.000000e+00> : vector<64x32xf32>
    %446 = tpu.matmul %444, %445, %cst_116 {dimension_numbers = #tpu.dot_dimension_numbers<[1], [0], [0], [1], [0, 0, 1, 1], [], []>} : vector<64x32xf32>, vector<32x32xf32>, vector<64x32xf32> -> vector<64x32xf32>
    %c0_117 = arith.constant 0 : index
    %c0_118 = arith.constant 0 : index
    %447 = vector.load %arg6[%c0_117, %c0_118] : memref<1x32xf32, #tpu.memory_space<vmem>>, vector<1x32xf32>
    %448 = vector.broadcast %447 : vector<1x32xf32> to vector<64x32xf32>
    %449 = arith.addf %446, %448 : vector<64x32xf32>
    %450 = vector.shape_cast %449 : vector<64x32xf32> to vector<8x8x32xf32>
    %451 = vector.extract_strided_slice %450 {offsets = [0, 0, 0], sizes = [4, 8, 32], strides = [1, 1, 1]} : vector<8x8x32xf32> to vector<4x8x32xf32>
    %452 = vector.extract_strided_slice %451 {offsets = [0, 0, 0], sizes = [2, 8, 32], strides = [1, 1, 1]} : vector<4x8x32xf32> to vector<2x8x32xf32>
    %453 = vector.extract_strided_slice %452 {offsets = [0, 0, 0], sizes = [1, 8, 32], strides = [1, 1, 1]} : vector<2x8x32xf32> to vector<1x8x32xf32>
    %454 = vector.extract_strided_slice %452 {offsets = [1, 0, 0], sizes = [1, 8, 32], strides = [1, 1, 1]} : vector<2x8x32xf32> to vector<1x8x32xf32>
    %455 = arith.maximumf %453, %454 : vector<1x8x32xf32>
    %456 = vector.extract_strided_slice %451 {offsets = [2, 0, 0], sizes = [2, 8, 32], strides = [1, 1, 1]} : vector<4x8x32xf32> to vector<2x8x32xf32>
    %457 = vector.extract_strided_slice %456 {offsets = [0, 0, 0], sizes = [1, 8, 32], strides = [1, 1, 1]} : vector<2x8x32xf32> to vector<1x8x32xf32>
    %458 = vector.extract_strided_slice %456 {offsets = [1, 0, 0], sizes = [1, 8, 32], strides = [1, 1, 1]} : vector<2x8x32xf32> to vector<1x8x32xf32>
    %459 = arith.maximumf %457, %458 : vector<1x8x32xf32>
    %460 = arith.maximumf %455, %459 : vector<1x8x32xf32>
    %461 = vector.extract_strided_slice %450 {offsets = [4, 0, 0], sizes = [4, 8, 32], strides = [1, 1, 1]} : vector<8x8x32xf32> to vector<4x8x32xf32>
    %462 = vector.extract_strided_slice %461 {offsets = [0, 0, 0], sizes = [2, 8, 32], strides = [1, 1, 1]} : vector<4x8x32xf32> to vector<2x8x32xf32>
    %463 = vector.extract_strided_slice %462 {offsets = [0, 0, 0], sizes = [1, 8, 32], strides = [1, 1, 1]} : vector<2x8x32xf32> to vector<1x8x32xf32>
    %464 = vector.extract_strided_slice %462 {offsets = [1, 0, 0], sizes = [1, 8, 32], strides = [1, 1, 1]} : vector<2x8x32xf32> to vector<1x8x32xf32>
    %465 = arith.maximumf %463, %464 : vector<1x8x32xf32>
    %466 = vector.extract_strided_slice %461 {offsets = [2, 0, 0], sizes = [2, 8, 32], strides = [1, 1, 1]} : vector<4x8x32xf32> to vector<2x8x32xf32>
    %467 = vector.extract_strided_slice %466 {offsets = [0, 0, 0], sizes = [1, 8, 32], strides = [1, 1, 1]} : vector<2x8x32xf32> to vector<1x8x32xf32>
    %468 = vector.extract_strided_slice %466 {offsets = [1, 0, 0], sizes = [1, 8, 32], strides = [1, 1, 1]} : vector<2x8x32xf32> to vector<1x8x32xf32>
    %469 = arith.maximumf %467, %468 : vector<1x8x32xf32>
    %470 = arith.maximumf %465, %469 : vector<1x8x32xf32>
    %471 = arith.maximumf %460, %470 : vector<1x8x32xf32>
    %472 = vector.broadcast %471 : vector<1x8x32xf32> to vector<8x8x32xf32>
    %473 = arith.subf %450, %472 : vector<8x8x32xf32>
    %474 = math.exp %473 : vector<8x8x32xf32>
    %475 = vector.extract_strided_slice %474 {offsets = [0, 0, 0], sizes = [4, 8, 32], strides = [1, 1, 1]} : vector<8x8x32xf32> to vector<4x8x32xf32>
    %476 = vector.extract_strided_slice %475 {offsets = [0, 0, 0], sizes = [2, 8, 32], strides = [1, 1, 1]} : vector<4x8x32xf32> to vector<2x8x32xf32>
    %477 = vector.extract_strided_slice %476 {offsets = [0, 0, 0], sizes = [1, 8, 32], strides = [1, 1, 1]} : vector<2x8x32xf32> to vector<1x8x32xf32>
    %478 = vector.extract_strided_slice %476 {offsets = [1, 0, 0], sizes = [1, 8, 32], strides = [1, 1, 1]} : vector<2x8x32xf32> to vector<1x8x32xf32>
    %479 = arith.addf %477, %478 : vector<1x8x32xf32>
    %480 = vector.extract_strided_slice %475 {offsets = [2, 0, 0], sizes = [2, 8, 32], strides = [1, 1, 1]} : vector<4x8x32xf32> to vector<2x8x32xf32>
    %481 = vector.extract_strided_slice %480 {offsets = [0, 0, 0], sizes = [1, 8, 32], strides = [1, 1, 1]} : vector<2x8x32xf32> to vector<1x8x32xf32>
    %482 = vector.extract_strided_slice %480 {offsets = [1, 0, 0], sizes = [1, 8, 32], strides = [1, 1, 1]} : vector<2x8x32xf32> to vector<1x8x32xf32>
    %483 = arith.addf %481, %482 : vector<1x8x32xf32>
    %484 = arith.addf %479, %483 : vector<1x8x32xf32>
    %485 = vector.extract_strided_slice %474 {offsets = [4, 0, 0], sizes = [4, 8, 32], strides = [1, 1, 1]} : vector<8x8x32xf32> to vector<4x8x32xf32>
    %486 = vector.extract_strided_slice %485 {offsets = [0, 0, 0], sizes = [2, 8, 32], strides = [1, 1, 1]} : vector<4x8x32xf32> to vector<2x8x32xf32>
    %487 = vector.extract_strided_slice %486 {offsets = [0, 0, 0], sizes = [1, 8, 32], strides = [1, 1, 1]} : vector<2x8x32xf32> to vector<1x8x32xf32>
    %488 = vector.extract_strided_slice %486 {offsets = [1, 0, 0], sizes = [1, 8, 32], strides = [1, 1, 1]} : vector<2x8x32xf32> to vector<1x8x32xf32>
    %489 = arith.addf %487, %488 : vector<1x8x32xf32>
    %490 = vector.extract_strided_slice %485 {offsets = [2, 0, 0], sizes = [2, 8, 32], strides = [1, 1, 1]} : vector<4x8x32xf32> to vector<2x8x32xf32>
    %491 = vector.extract_strided_slice %490 {offsets = [0, 0, 0], sizes = [1, 8, 32], strides = [1, 1, 1]} : vector<2x8x32xf32> to vector<1x8x32xf32>
    %492 = vector.extract_strided_slice %490 {offsets = [1, 0, 0], sizes = [1, 8, 32], strides = [1, 1, 1]} : vector<2x8x32xf32> to vector<1x8x32xf32>
    %493 = arith.addf %491, %492 : vector<1x8x32xf32>
    %494 = arith.addf %489, %493 : vector<1x8x32xf32>
    %495 = arith.addf %484, %494 : vector<1x8x32xf32>
    %496 = tpu.reciprocal %495 {approx = true} : vector<1x8x32xf32> -> vector<1x8x32xf32>
    %497 = vector.broadcast %496 : vector<1x8x32xf32> to vector<8x8x32xf32>
    %498 = arith.mulf %474, %497 : vector<8x8x32xf32>
    %499 = vector.shape_cast %498 : vector<8x8x32xf32> to vector<64x32xf32>
    %c0_119 = arith.constant 0 : index
    %c0_120 = arith.constant 0 : index
    %500 = vector.load %arg7[%c0_119, %c0_120] : memref<1x32xf32, #tpu.memory_space<vmem>>, vector<1x32xf32>
    %501 = vector.broadcast %500 : vector<1x32xf32> to vector<64x32xf32>
    %502 = arith.mulf %499, %501 : vector<64x32xf32>
    %cst_121 = arith.constant dense<0.000000e+00> : vector<64xf32>
    %503 = vector.multi_reduction <add>, %502, %cst_121 [1] : vector<64x32xf32> to vector<64xf32>
    %504 = vector.shape_cast %503 : vector<64xf32> to vector<64x1xf32>
    %c0_122 = arith.constant 0 : index
    %c0_123 = arith.constant 0 : index
    %505 = vector.load %arg8[%c0_122, %c0_123] : memref<1x1xf32, #tpu.memory_space<vmem>>, vector<1x1xf32>
    %506 = vector.broadcast %505 : vector<1x1xf32> to vector<64x1xf32>
    %507 = arith.addf %504, %506 : vector<64x1xf32>
    %c0_124 = arith.constant 0 : index
    %c0_125 = arith.constant 0 : index
    %508 = vector.load %arg9[%c0_124, %c0_125] : memref<64x1xf32, #tpu.memory_space<vmem>>, vector<64x1xf32>
    tpu.vector_store %arg9[%c0_124, %c0_125], %507 {strides = array<i32>} : memref<64x1xf32, #tpu.memory_space<vmem>>, vector<64x1xf32>,
    return
  }
}

</mosaic_0001>

<llo_original>
// kernel: net_forward.1
$region0: #{net_forward.1}
  #allocation0 [shape = 'u32[]', space=smem, size = 0x4, offset = 0x4, fixed_abs, tag = 'smem constant byte address 0x4 - core index']
  #allocation1 [shape = 'u32[144,128]{1,0:T(1,128)}', space=vmem, size = 0x12000, scoped, tag = 'internal scratch']
  #allocation2 [shape = 'f32[64,128]{1,0:T(8,128)}', space=vmem, size = 0x8000, scoped, tag = 'scratch operand']
  #allocation3 [shape = 'f32[8,8,32]{2,1,0:T(8,128)}', space=vmem, size = 0x8000, scoped, tag = 'scratch operand']
  #allocation4 [shape = 'f32[1,1]{1,0:T(1,128)S(1)}', space=vmem, size = 0x200, scoped, tag = 'scoped memory for net_forward.1']
  %s0 = inlined_call_operand.vmem [shape: f32[64,16], index: 0, kind: input, shape index: {}]
  %s1 = inlined_call_operand.vmem [shape: f32[16,128], index: 1, kind: input, shape index: {}]
  %s2 = inlined_call_operand.vmem [shape: f32[1,128], index: 2, kind: input, shape index: {}]
  %s3 = inlined_call_operand.vmem [shape: f32[64,256], index: 3, kind: input, shape index: {}]
  %s4 = inlined_call_operand.vmem [shape: f32[1,128], index: 4, kind: input, shape index: {}]
  %s5 = inlined_call_operand.vmem [shape: f32[32,32], index: 5, kind: input, shape index: {}]
  %s6 = inlined_call_operand.vmem [shape: f32[1,32], index: 6, kind: input, shape index: {}]
  %s7 = inlined_call_operand.vmem [shape: f32[1,32], index: 7, kind: input, shape index: {}]
  %s8 = inlined_call_operand.<no memory space> [shape: f32[1,1], index: 8, kind: input, shape index: {}]
  %s9 = inlined_call_operand.vmem [shape: f32[64,1], index: 9, kind: output, shape index: {}]
  %s10 = sld [smem:[#allocation0]]
  $region46: #{net_forward.1} parent=0
    _
  %s12 = ssub.s32 1, %s10
  %s13 = scalar_select 0, %s12, %s10
  %v14 = vstv %s8
  %15 = vst [vmem:[#allocation4] sm:$0x1] %v14
  // Predicated region
  $region2: #{net_forward.1} parent=0 // pred_check
    _
  $region3: #{net_forward.1} parent=0 // pred_check_branch
    %17 = sbr.rel (0) target = $region5
  $region4: #{net_forward.1} parent=0 // pred_region
    _
  $region5: #{net_forward.1} parent=0 // pred_fallthru
    _
  // Predicated region
  $region6: #{net_forward.1} parent=0 // pred_check
    _
  $region7: #{net_forward.1} parent=0 // pred_check_branch
    %19 = sbr.rel (0) target = $region9
  $region8: #{net_forward.1} parent=0 // pred_region
    _
  $region9: #{net_forward.1} parent=0 // pred_fallthru
    _
  // Predicated region
  $region10: #{net_forward.1} parent=0 // pred_check
    _
  $region11: #{net_forward.1} parent=0 // pred_check_branch
    %21 = sbr.rel (0) target = $region13
  $region12: #{net_forward.1} parent=0 // pred_region
    _
  $region13: #{net_forward.1} parent=0 // pred_fallthru
    _
  // Predicated region
  $region14: #{net_forward.1} parent=0 // pred_check
    _
  $region15: #{net_forward.1} parent=0 // pred_check_branch
    %23 = sbr.rel (0) target = $region17
  $region16: #{net_forward.1} parent=0 // pred_region
    _
  $region17: #{net_forward.1} parent=0 // pred_fallthru
    _
  // Predicated region
  $region18: #{net_forward.1} parent=0 // pred_check
    _
  $region19: #{net_forward.1} parent=0 // pred_check_branch
    %25 = sbr.rel (0) target = $region21
  $region20: #{net_forward.1} parent=0 // pred_region
    _
  $region21: #{net_forward.1} parent=0 // pred_fallthru
    _
  // Predicated region
  $region22: #{net_forward.1} parent=0 // pred_check
    _
  $region23: #{net_forward.1} parent=0 // pred_check_branch
    %27 = sbr.rel (0) target = $region25
  $region24: #{net_forward.1} parent=0 // pred_region
    _
  $region25: #{net_forward.1} parent=0 // pred_fallthru
    _
  // Predicated region
  $region26: #{net_forward.1} parent=0 // pred_check
    _
  $region27: #{net_forward.1} parent=0 // pred_check_branch
    %29 = sbr.rel (0) target = $region29
  $region28: #{net_forward.1} parent=0 // pred_region
    _
  $region29: #{net_forward.1} parent=0 // pred_fallthru
    _
  // Predicated region
  $region30: #{net_forward.1} parent=0 // pred_check
    _
  $region31: #{net_forward.1} parent=0 // pred_check_branch
    %31 = sbr.rel (0) target = $region33
  $region32: #{net_forward.1} parent=0 // pred_region
    _
  $region33: #{net_forward.1} parent=0 // pred_fallthru
    _
  // Predicated region
  $region34: #{net_forward.1} parent=0 // pred_check
    _
  $region35: #{net_forward.1} parent=0 // pred_check_branch
    %33 = sbr.rel (0) target = $region37
  $region36: #{net_forward.1} parent=0 // pred_region
    _
  $region37: #{net_forward.1} parent=0 // pred_fallthru
    _
  %v34 = vld [vmem:[%s0] sm:$0xff]
  %v35 = vld [vmem:[%s0 + $0x8] sm:$0xff]
  %v36 = vld [vmem:[%s0 + $0x10] sm:$0xff]
  %v37 = vld [vmem:[%s0 + $0x18] sm:$0xff]
  %v38 = vld [vmem:[%s0 + $0x20] sm:$0xff]
  %v39 = vld [vmem:[%s0 + $0x28] sm:$0xff]
  %v40 = vld [vmem:[%s0 + $0x30] sm:$0xff]
  %v41 = vld [vmem:[%s0 + $0x38] sm:$0xff]
  %v42 = vld [vmem:[%s1] sm:$0xff]
  %v43 = vld [vmem:[%s1 + $0x8] sm:$0xff]
  %v44 = vld [vmem:[%s2] sm:$0x1]
  %v46 = vlaneseq
  %v47 = vshrl.u32 %v46, 7
  %v48 = vsub.s32 0, %v47
  %v49 = vrot.slane %v44, %v48
  %vm51 = vcmask 130048
  %v53 = vsel %vm51, %v34, 0
  %v56 = vsel %vm51, %v35, 0
  %v59 = vsel %vm51, %v36, 0
  %v62 = vsel %vm51, %v37, 0
  %v65 = vsel %vm51, %v38, 0
  %v68 = vsel %vm51, %v39, 0
  %v71 = vsel %vm51, %v40, 0
  %v74 = vsel %vm51, %v41, 0
  %76 = vmatprep.subr.mxu0 0.0
  %77 = vmatpush1.msra.mxu0 %v42
  %78 = vmatprep.subr.mxu0 0.0
  %79 = vmatpush1.msra.mxu0 %v43
  %80 = vmatprep.subr.mxu0 0.0
  %81 = vmatpush1.msra.mxu0 0.0
  %82 = vmatprep.subr.mxu0 0.0
  %83 = vmatpush1.msra.mxu0 0.0
  %84 = vmatprep.subr.mxu0 0.0
  %85 = vmatpush1.msra.mxu0 0.0
  %86 = vmatprep.subr.mxu0 0.0
  %87 = vmatpush1.msra.mxu0 0.0
  %88 = vmatprep.subr.mxu0 0.0
  %89 = vmatpush1.msra.mxu0 0.0
  %90 = vmatprep.subr.mxu0 0.0
  %91 = vmatpush1.msra.mxu0 0.0
  %92 = vmatprep.subr.mxu0 0.0
  %93 = vmatpush1.msra.mxu0 0.0
  %94 = vmatprep.subr.mxu0 0.0
  %95 = vmatpush1.msra.mxu0 0.0
  %96 = vmatprep.subr.mxu0 0.0
  %97 = vmatpush1.msra.mxu0 0.0
  %98 = vmatprep.subr.mxu0 0.0
  %99 = vmatpush1.msra.mxu0 0.0
  %100 = vmatprep.subr.mxu0 0.0
  %101 = vmatpush1.msra.mxu0 0.0
  %102 = vmatprep.subr.mxu0 0.0
  %103 = vmatpush1.msra.mxu0 0.0
  %104 = vmatprep.subr.mxu0 0.0
  %105 = vmatpush1.msra.mxu0 0.0
  %106 = vmatprep.subr.mxu0 0.0
  %107 = vmatpush1.msra.mxu0 0.0
  %108 = vmatprep.subr.mxu0 0.0
  %109 = vmatpush1.msra.mxu0 0.0
  %110 = vmatprep.subr.mxu0 0.0
  %111 = vmatpush1.msra.mxu0 0.0
  %112 = vmatprep.subr.mxu0 0.0
  %113 = vmatpush1.msra.mxu0 0.0
  %114 = vmatprep.subr.mxu0 0.0
  %115 = vmatpush1.msra.mxu0 0.0
  %116 = vmatprep.subr.mxu0 0.0
  %117 = vmatpush1.msra.mxu0 0.0
  %118 = vmatprep.subr.mxu0 0.0
  %119 = vmatpush1.msra.mxu0 0.0
  %120 = vmatprep.subr.mxu0 0.0
  %121 = vmatpush1.msra.mxu0 0.0
  %122 = vmatprep.subr.mxu0 0.0
  %123 = vmatpush1.msra.mxu0 0.0
  %124 = vmatprep.subr.mxu0 0.0
  %125 = vmatpush1.msra.mxu0 0.0
  %126 = vmatprep.subr.mxu0 0.0
  %127 = vmatpush1.msra.mxu0 0.0
  %128 = vmatprep.subr.mxu0 0.0
  %129 = vmatpush1.msra.mxu0 0.0
  %130 = vmatprep.subr.mxu0 0.0
  %131 = vmatpush1.msra.mxu0 0.0
  %132 = vmatprep.subr.mxu0 0.0
  %133 = vmatpush1.msra.mxu0 0.0
  %134 = vmatprep.subr.mxu0 0.0
  %135 = vmatpush1.msra.mxu0 0.0
  %136 = vmatprep.subr.mxu0 0.0
  %137 = vmatpush1.msra.mxu0 0.0
  %138 = vmatprep.subr.mxu0 0.0
  %139 = vmatpush1.msra.mxu0 0.0
  %140 = vmatprep.mubr.f32.mxu0 0.0
  %141 = vmatmul.mubr.f32.gmra.mrb[0].mxu0 %v53
  %v142 = vpop.f32.mrb[0].mxu0
  %v143 = vadd.f32 %v49, %v142
  %v144 = vpop.f32.mrb[0].mxu0
  %145 = vmatprep.mubr.f32.mxu0 0.0
  %146 = vmatmul.mubr.f32.gmra.mrb[0].mxu0 %v56
  %v147 = vpop.f32.mrb[0].mxu0
  %v148 = vadd.f32 %v49, %v147
  %v149 = vpop.f32.mrb[0].mxu0
  %150 = vmatprep.mubr.f32.mxu0 0.0
  %151 = vmatmul.mubr.f32.gmra.mrb[0].mxu0 %v59
  %v152 = vpop.f32.mrb[0].mxu0
  %v153 = vadd.f32 %v49, %v152
  %v154 = vpop.f32.mrb[0].mxu0
  %155 = vmatprep.mubr.f32.mxu0 0.0
  %156 = vmatmul.mubr.f32.gmra.mrb[0].mxu0 %v62
  %v157 = vpop.f32.mrb[0].mxu0
  %v158 = vadd.f32 %v49, %v157
  %v159 = vpop.f32.mrb[0].mxu0
  %160 = vmatprep.mubr.f32.mxu0 0.0
  %161 = vmatmul.mubr.f32.gmra.mrb[0].mxu0 %v65
  %v162 = vpop.f32.mrb[0].mxu0
  %v163 = vadd.f32 %v49, %v162
  %v164 = vpop.f32.mrb[0].mxu0
  %165 = vmatprep.mubr.f32.mxu0 0.0
  %166 = vmatmul.mubr.f32.gmra.mrb[0].mxu0 %v68
  %v167 = vpop.f32.mrb[0].mxu0
  %v168 = vadd.f32 %v49, %v167
  %v169 = vpop.f32.mrb[0].mxu0
  %170 = vmatprep.mubr.f32.mxu0 0.0
  %171 = vmatmul.mubr.f32.gmra.mrb[0].mxu0 %v71
  %v172 = vpop.f32.mrb[0].mxu0
  %v173 = vadd.f32 %v49, %v172
  %v174 = vpop.f32.mrb[0].mxu0
  %175 = vmatprep.mubr.f32.mxu0 0.0
  %176 = vmatmul.mubr.f32.gmra.mrb[0].mxu0 %v74
  %v177 = vpop.f32.mrb[0].mxu0
  %v178 = vadd.f32 %v49, %v177
  %v179 = vpop.f32.mrb[0].mxu0
  %180 = vdwg.mxu0
  %181 = vst [vmem:[#allocation2] sm:$0xff] %v143
  %182 = vst [vmem:[#allocation2 + $0x8] sm:$0xff] %v148
  %183 = vst [vmem:[#allocation2 + $0x10] sm:$0xff] %v153
  %184 = vst [vmem:[#allocation2 + $0x18] sm:$0xff] %v158
  %185 = vst [vmem:[#allocation2 + $0x20] sm:$0xff] %v163
  %186 = vst [vmem:[#allocation2 + $0x28] sm:$0xff] %v168
  %187 = vst [vmem:[#allocation2 + $0x30] sm:$0xff] %v173
  %188 = vst [vmem:[#allocation2 + $0x38] sm:$0xff] %v178
  %v189 = vld [vmem:[%s4] sm:$0x1]
  %v190 = vld [vmem:[#allocation2] sm:$0xff]
  %v191 = vadd.f32 %v190, 0.0
  %v192 = vxor.u32 %v191, 2147483648
  %v193 = vmul.f32 %v192, 1.442695
  %v194 = vpow.pop %v193
  %v195 = vadd.f32 %v194, 1.0
  %v196 = vrcp.pop %v195
  %v197 = vmul.f32 1.0, %v196
  %v198 = vmul.f32 %v197, 2.0
  %v199 = vsub.f32 %v198, 1.0
  %v200 = vmul.f32 %v197, 0.0
  %202 = vrot.lane.b32.xlu0 %v199, 64
  %v203 = vpop.permute.xlu0 %202
  %v205 = vmul.f32 %v197, %v203
  %207 = vrot.lane.b32.xlu0 %v205, 32
  %v208 = vpop.permute.xlu0 %207
  %v210 = vadd.f32 %v200, %v208
  %v211 = vtanh.pop %v210
  %213 = vrot.lane.b32.xlu0 %v211, 64
  %v214 = vpop.permute.xlu0 %213
  %v216 = vmul.f32 %v197, %v214
  %218 = vrot.lane.b32.xlu0 %v216, 32
  %v219 = vpop.permute.xlu0 %218
  %vm221 = vcmask 261120
  %v222 = vsel %vm221, %v219, 0.0
  %v223 = vld [vmem:[%s3] sm:$0xff]
  %v224 = vld [vmem:[%s3 + $0x8] sm:$0xff]
  %v225 = vld [vmem:[%s3 + $0x10] sm:$0xff]
  %v226 = vld [vmem:[%s3 + $0x18] sm:$0xff]
  %v227 = vld [vmem:[%s3 + $0x20] sm:$0xff]
  %v228 = vld [vmem:[%s3 + $0x28] sm:$0xff]
  %v229 = vld [vmem:[%s3 + $0x30] sm:$0xff]
  %v230 = vld [vmem:[%s3 + $0x38] sm:$0xff]
  %v231 = vld [vmem:[%s3 + $0x40] sm:$0xff]
  %v232 = vld [vmem:[%s3 + $0x48] sm:$0xff]
  %v233 = vld [vmem:[%s3 + $0x50] sm:$0xff]
  %v234 = vld [vmem:[%s3 + $0x58] sm:$0xff]
  %v235 = vld [vmem:[%s3 + $0x60] sm:$0xff]
  %v236 = vld [vmem:[%s3 + $0x68] sm:$0xff]
  %v237 = vld [vmem:[%s3 + $0x70] sm:$0xff]
  %v238 = vld [vmem:[%s3 + $0x78] sm:$0xff]
  %vm239 = vcmask 523264
  %v241 = vsel %vm239, %v222, 0
  %243 = vmatprep.subr.mxu0 %v224
  %244 = vmatpush1.msra.mxu0 %v223
  %245 = vmatprep.subr.mxu0 %v226
  %246 = vmatpush1.msra.mxu0 %v225
  %247 = vmatprep.subr.mxu0 %v228
  %248 = vmatpush1.msra.mxu0 %v227
  %249 = vmatprep.subr.mxu0 %v230
  %250 = vmatpush1.msra.mxu0 %v229
  %251 = vmatprep.subr.mxu0 %v232
  %252 = vmatpush1.msra.mxu0 %v231
  %253 = vmatprep.subr.mxu0 %v234
  %254 = vmatpush1.msra.mxu0 %v233
  %255 = vmatprep.subr.mxu0 %v236
  %256 = vmatpush1.msra.mxu0 %v235
  %257 = vmatprep.subr.mxu0 %v238
  %258 = vmatpush1.msra.mxu0 %v237
  %259 = vmatprep.subr.mxu0 0.0
  %260 = vmatpush1.msra.mxu0 0.0
  %261 = vmatprep.subr.mxu0 0.0
  %262 = vmatpush1.msra.mxu0 0.0
  %263 = vmatprep.subr.mxu0 0.0
  %264 = vmatpush1.msra.mxu0 0.0
  %265 = vmatprep.subr.mxu0 0.0
  %266 = vmatpush1.msra.mxu0 0.0
  %267 = vmatprep.subr.mxu0 0.0
  %268 = vmatpush1.msra.mxu0 0.0
  %269 = vmatprep.subr.mxu0 0.0
  %270 = vmatpush1.msra.mxu0 0.0
  %271 = vmatprep.subr.mxu0 0.0
  %272 = vmatpush1.msra.mxu0 0.0
  %273 = vmatprep.subr.mxu0 0.0
  %274 = vmatpush1.msra.mxu0 0.0
  %275 = vmatprep.subr.mxu0 0.0
  %276 = vmatpush1.msra.mxu0 0.0
  %277 = vmatprep.subr.mxu0 0.0
  %278 = vmatpush1.msra.mxu0 0.0
  %279 = vmatprep.subr.mxu0 0.0
  %280 = vmatpush1.msra.mxu0 0.0
  %281 = vmatprep.subr.mxu0 0.0
  %282 = vmatpush1.msra.mxu0 0.0
  %283 = vmatprep.subr.mxu0 0.0
  %284 = vmatpush1.msra.mxu0 0.0
  %285 = vmatprep.subr.mxu0 0.0
  %286 = vmatpush1.msra.mxu0 0.0
  %287 = vmatprep.subr.mxu0 0.0
  %288 = vmatpush1.msra.mxu0 0.0
  %289 = vmatprep.subr.mxu0 0.0
  %290 = vmatpush1.msra.mxu0 0.0
  %291 = vmatprep.subr.mxu0 0.0
  %292 = vmatpush1.msra.mxu0 0.0
  %293 = vmatprep.subr.mxu0 0.0
  %294 = vmatpush1.msra.mxu0 0.0
  %295 = vmatprep.subr.mxu0 0.0
  %296 = vmatpush1.msra.mxu0 0.0
  %297 = vmatprep.subr.mxu0 0.0
  %298 = vmatpush1.msra.mxu0 0.0
  %299 = vmatprep.subr.mxu0 0.0
  %300 = vmatpush1.msra.mxu0 0.0
  %301 = vmatprep.subr.mxu0 0.0
  %302 = vmatpush1.msra.mxu0 0.0
  %303 = vmatprep.subr.mxu0 0.0
  %304 = vmatpush1.msra.mxu0 0.0
  %305 = vmatprep.subr.mxu0 0.0
  %306 = vmatpush1.msra.mxu0 0.0
  %307 = vmatprep.mubr.f32.mxu0 0.0
  %308 = vmatmul.mubr.f32.gmra.mrb[0].mxu0 %v241
  %v309 = vpop.f32.mrb[0].mxu0
  %v310 = vadd.f32 0.0, %v309
  %v311 = vpop.f32.mrb[0].mxu0
  %v312 = vadd.f32 0.0, %v311
  %313 = vdwg.mxu0
  %v315 = vlaneseq
  %v316 = vshrl.u32 %v315, 7
  %v317 = vsub.s32 0, %v316
  %v318 = vrot.slane %v189, %v317
  %v320 = vadd.f32 %v310, %v318
  %v321 = vxor.u32 %v320, 2147483648
  %v322 = vmul.f32 %v321, 1.442695
  %v323 = vpow.pop %v322
  %v324 = vadd.f32 %v323, 1.0
  %v325 = vrcp.pop %v324
  %v326 = vmul.f32 1.0, %v325
  %v327 = vmul.f32 %v326, 2.0
  %v328 = vsub.f32 %v327, 1.0
  %v329 = vmul.f32 %v326, 0.0
  %331 = vrot.lane.b32.xlu0 %v328, 64
  %v332 = vpop.permute.xlu0 %331
  %v334 = vmul.f32 %v326, %v332
  %336 = vrot.lane.b32.xlu0 %v334, 32
  %v337 = vpop.permute.xlu0 %336
  %v339 = vadd.f32 %v329, %v337
  %v340 = vtanh.pop %v339
  %342 = vrot.lane.b32.xlu0 %v340, 64
  %v343 = vpop.permute.xlu0 %342
  %v345 = vmul.f32 %v326, %v343
  %347 = vrot.lane.b32.xlu0 %v345, 32
  %v348 = vpop.permute.xlu0 %347
  %350 = vst.msk [vmem:[#allocation3] sm:$0xff] %vm221, %v348
  %v351 = vld [vmem:[#allocation2 + $0x8] sm:$0xff]
  %v352 = vadd.f32 %v351, %v312
  %v353 = vxor.u32 %v352, 2147483648
  %v354 = vmul.f32 %v353, 1.442695
  %v355 = vpow.pop %v354
  %v356 = vadd.f32 %v355, 1.0
  %v357 = vrcp.pop %v356
  %v358 = vmul.f32 1.0, %v357
  %v359 = vmul.f32 %v358, 2.0
  %v360 = vsub.f32 %v359, 1.0
  %v361 = vmul.f32 %v358, %v210
  %363 = vrot.lane.b32.xlu0 %v360, 64
  %v364 = vpop.permute.xlu0 %363
  %v366 = vmul.f32 %v358, %v364
  %368 = vrot.lane.b32.xlu0 %v366, 32
  %v369 = vpop.permute.xlu0 %368
  %v371 = vadd.f32 %v361, %v369
  %v372 = vtanh.pop %v371
  %374 = vrot.lane.b32.xlu0 %v372, 64
  %v375 = vpop.permute.xlu0 %374
  %v377 = vmul.f32 %v358, %v375
  %379 = vrot.lane.b32.xlu0 %v377, 32
  %v380 = vpop.permute.xlu0 %379
  %382 = vrot.lane.b32.xlu0 %v345, 64
  %v383 = vpop.permute.xlu0 %382
  %v385 = vsel %vm221, %v380, %v383
  %v386 = vld [vmem:[%s3] sm:$0xff]
  %v387 = vld [vmem:[%s3 + $0x8] sm:$0xff]
  %v388 = vld [vmem:[%s3 + $0x10] sm:$0xff]
  %v389 = vld [vmem:[%s3 + $0x18] sm:$0xff]
  %v390 = vld [vmem:[%s3 + $0x20] sm:$0xff]
  %v391 = vld [vmem:[%s3 + $0x28] sm:$0xff]
  %v392 = vld [vmem:[%s3 + $0x30] sm:$0xff]
  %v393 = vld [vmem:[%s3 + $0x38] sm:$0xff]
  %v394 = vld [vmem:[%s3 + $0x40] sm:$0xff]
  %v395 = vld [vmem:[%s3 + $0x48] sm:$0xff]
  %v396 = vld [vmem:[%s3 + $0x50] sm:$0xff]
  %v397 = vld [vmem:[%s3 + $0x58] sm:$0xff]
  %v398 = vld [vmem:[%s3 + $0x60] sm:$0xff]
  %v399 = vld [vmem:[%s3 + $0x68] sm:$0xff]
  %v400 = vld [vmem:[%s3 + $0x70] sm:$0xff]
  %v401 = vld [vmem:[%s3 + $0x78] sm:$0xff]
  %v403 = vsel %vm239, %v385, 0
  %405 = vmatprep.subr.mxu0 %v387
  %406 = vmatpush1.msra.mxu0 %v386
  %407 = vmatprep.subr.mxu0 %v389
  %408 = vmatpush1.msra.mxu0 %v388
  %409 = vmatprep.subr.mxu0 %v391
  %410 = vmatpush1.msra.mxu0 %v390
  %411 = vmatprep.subr.mxu0 %v393
  %412 = vmatpush1.msra.mxu0 %v392
  %413 = vmatprep.subr.mxu0 %v395
  %414 = vmatpush1.msra.mxu0 %v394
  %415 = vmatprep.subr.mxu0 %v397
  %416 = vmatpush1.msra.mxu0 %v396
  %417 = vmatprep.subr.mxu0 %v399
  %418 = vmatpush1.msra.mxu0 %v398
  %419 = vmatprep.subr.mxu0 %v401
  %420 = vmatpush1.msra.mxu0 %v400
  %421 = vmatprep.subr.mxu0 0.0
  %422 = vmatpush1.msra.mxu0 0.0
  %423 = vmatprep.subr.mxu0 0.0
  %424 = vmatpush1.msra.mxu0 0.0
  %425 = vmatprep.subr.mxu0 0.0
  %426 = vmatpush1.msra.mxu0 0.0
  %427 = vmatprep.subr.mxu0 0.0
  %428 = vmatpush1.msra.mxu0 0.0
  %429 = vmatprep.subr.mxu0 0.0
  %430 = vmatpush1.msra.mxu0 0.0
  %431 = vmatprep.subr.mxu0 0.0
  %432 = vmatpush1.msra.mxu0 0.0
  %433 = vmatprep.subr.mxu0 0.0
  %434 = vmatpush1.msra.mxu0 0.0
  %435 = vmatprep.subr.mxu0 0.0
  %436 = vmatpush1.msra.mxu0 0.0
  %437 = vmatprep.subr.mxu0 0.0
  %438 = vmatpush1.msra.mxu0 0.0
  %439 = vmatprep.subr.mxu0 0.0
  %440 = vmatpush1.msra.mxu0 0.0
  %441 = vmatprep.subr.mxu0 0.0
  %442 = vmatpush1.msra.mxu0 0.0
  %443 = vmatprep.subr.mxu0 0.0
  %444 = vmatpush1.msra.mxu0 0.0
  %445 = vmatprep.subr.mxu0 0.0
  %446 = vmatpush1.msra.mxu0 0.0
  %447 = vmatprep.subr.mxu0 0.0
  %448 = vmatpush1.msra.mxu0 0.0
  %449 = vmatprep.subr.mxu0 0.0
  %450 = vmatpush1.msra.mxu0 0.0
  %451 = vmatprep.subr.mxu0 0.0
  %452 = vmatpush1.msra.mxu0 0.0
  %453 = vmatprep.subr.mxu0 0.0
  %454 = vmatpush1.msra.mxu0 0.0
  %455 = vmatprep.subr.mxu0 0.0
  %456 = vmatpush1.msra.mxu0 0.0
  %457 = vmatprep.subr.mxu0 0.0
  %458 = vmatpush1.msra.mxu0 0.0
  %459 = vmatprep.subr.mxu0 0.0
  %460 = vmatpush1.msra.mxu0 0.0
  %461 = vmatprep.subr.mxu0 0.0
  %462 = vmatpush1.msra.mxu0 0.0
  %463 = vmatprep.subr.mxu0 0.0
  %464 = vmatpush1.msra.mxu0 0.0
  %465 = vmatprep.subr.mxu0 0.0
  %466 = vmatpush1.msra.mxu0 0.0
  %467 = vmatprep.subr.mxu0 0.0
  %468 = vmatpush1.msra.mxu0 0.0
  %469 = vmatprep.mubr.f32.mxu0 0.0
  %470 = vmatmul.mubr.f32.gmra.mrb[0].mxu0 %v403
  %v471 = vpop.f32.mrb[0].mxu0
  %v472 = vadd.f32 0.0, %v471
  %v473 = vpop.f32.mrb[0].mxu0
  %v474 = vadd.f32 0.0, %v473
  %475 = vdwg.mxu0
  %v476 = vadd.f32 %v472, %v318
  %v477 = vxor.u32 %v476, 2147483648
  %v478 = vmul.f32 %v477, 1.442695
  %v479 = vpow.pop %v478
  %v480 = vadd.f32 %v479, 1.0
  %v481 = vrcp.pop %v480
  %v482 = vmul.f32 1.0, %v481
  %v483 = vmul.f32 %v482, 2.0
  %v484 = vsub.f32 %v483, 1.0
  %v485 = vmul.f32 %v482, %v339
  %487 = vrot.lane.b32.xlu0 %v484, 64
  %v488 = vpop.permute.xlu0 %487
  %v490 = vmul.f32 %v482, %v488
  %492 = vrot.lane.b32.xlu0 %v490, 32
  %v493 = vpop.permute.xlu0 %492
  %v495 = vadd.f32 %v485, %v493
  %v496 = vtanh.pop %v495
  %498 = vrot.lane.b32.xlu0 %v496, 64
  %v499 = vpop.permute.xlu0 %498
  %v501 = vmul.f32 %v482, %v499
  %503 = vrot.lane.b32.xlu0 %v501, 32
  %v504 = vpop.permute.xlu0 %503
  %s506 = scalar_lea.vmem [#allocation3], 8
  %507 = vst.msk [vmem:[%s506] sm:$0xff] %vm221, %v504
  %v508 = vld [vmem:[#allocation2 + $0x10] sm:$0xff]
  %v509 = vadd.f32 %v508, %v474
  %v510 = vxor.u32 %v509, 2147483648
  %v511 = vmul.f32 %v510, 1.442695
  %v512 = vpow.pop %v511
  %v513 = vadd.f32 %v512, 1.0
  %v514 = vrcp.pop %v513
  %v515 = vmul.f32 1.0, %v514
  %v516 = vmul.f32 %v515, 2.0
  %v517 = vsub.f32 %v516, 1.0
  %v518 = vmul.f32 %v515, %v371
  %520 = vrot.lane.b32.xlu0 %v517, 64
  %v521 = vpop.permute.xlu0 %520
  %v523 = vmul.f32 %v515, %v521
  %525 = vrot.lane.b32.xlu0 %v523, 32
  %v526 = vpop.permute.xlu0 %525
  %v528 = vadd.f32 %v518, %v526
  %v529 = vtanh.pop %v528
  %531 = vrot.lane.b32.xlu0 %v529, 64
  %v532 = vpop.permute.xlu0 %531
  %v534 = vmul.f32 %v515, %v532
  %536 = vrot.lane.b32.xlu0 %v534, 32
  %v537 = vpop.permute.xlu0 %536
  %539 = vrot.lane.b32.xlu0 %v501, 64
  %v540 = vpop.permute.xlu0 %539
  %v542 = vsel %vm221, %v537, %v540
  %v543 = vld [vmem:[%s3] sm:$0xff]
  %v544 = vld [vmem:[%s3 + $0x8] sm:$0xff]
  %v545 = vld [vmem:[%s3 + $0x10] sm:$0xff]
  %v546 = vld [vmem:[%s3 + $0x18] sm:$0xff]
  %v547 = vld [vmem:[%s3 + $0x20] sm:$0xff]
  %v548 = vld [vmem:[%s3 + $0x28] sm:$0xff]
  %v549 = vld [vmem:[%s3 + $0x30] sm:$0xff]
  %v550 = vld [vmem:[%s3 + $0x38] sm:$0xff]
  %v551 = vld [vmem:[%s3 + $0x40] sm:$0xff]
  %v552 = vld [vmem:[%s3 + $0x48] sm:$0xff]
  %v553 = vld [vmem:[%s3 + $0x50] sm:$0xff]
  %v554 = vld [vmem:[%s3 + $0x58] sm:$0xff]
  %v555 = vld [vmem:[%s3 + $0x60] sm:$0xff]
  %v556 = vld [vmem:[%s3 + $0x68] sm:$0xff]
  %v557 = vld [vmem:[%s3 + $0x70] sm:$0xff]
  %v558 = vld [vmem:[%s3 + $0x78] sm:$0xff]
  %v560 = vsel %vm239, %v542, 0
  %562 = vmatprep.subr.mxu0 %v544
  %563 = vmatpush1.msra.mxu0 %v543
  %564 = vmatprep.subr.mxu0 %v546
  %565 = vmatpush1.msra.mxu0 %v545
  %566 = vmatprep.subr.mxu0 %v548
  %567 = vmatpush1.msra.mxu0 %v547
  %568 = vmatprep.subr.mxu0 %v550
  %569 = vmatpush1.msra.mxu0 %v549
  %570 = vmatprep.subr.mxu0 %v552
  %571 = vmatpush1.msra.mxu0 %v551
  %572 = vmatprep.subr.mxu0 %v554
  %573 = vmatpush1.msra.mxu0 %v553
  %574 = vmatprep.subr.mxu0 %v556
  %575 = vmatpush1.msra.mxu0 %v555
  %576 = vmatprep.subr.mxu0 %v558
  %577 = vmatpush1.msra.mxu0 %v557
  %578 = vmatprep.subr.mxu0 0.0
  %579 = vmatpush1.msra.mxu0 0.0
  %580 = vmatprep.subr.mxu0 0.0
  %581 = vmatpush1.msra.mxu0 0.0
  %582 = vmatprep.subr.mxu0 0.0
  %583 = vmatpush1.msra.mxu0 0.0
  %584 = vmatprep.subr.mxu0 0.0
  %585 = vmatpush1.msra.mxu0 0.0
  %586 = vmatprep.subr.mxu0 0.0
  %587 = vmatpush1.msra.mxu0 0.0
  %588 = vmatprep.subr.mxu0 0.0
  %589 = vmatpush1.msra.mxu0 0.0
  %590 = vmatprep.subr.mxu0 0.0
  %591 = vmatpush1.msra.mxu0 0.0
  %592 = vmatprep.subr.mxu0 0.0
  %593 = vmatpush1.msra.mxu0 0.0
  %594 = vmatprep.subr.mxu0 0.0
  %595 = vmatpush1.msra.mxu0 0.0
  %596 = vmatprep.subr.mxu0 0.0
  %597 = vmatpush1.msra.mxu0 0.0
  %598 = vmatprep.subr.mxu0 0.0
  %599 = vmatpush1.msra.mxu0 0.0
  %600 = vmatprep.subr.mxu0 0.0
  %601 = vmatpush1.msra.mxu0 0.0
  %602 = vmatprep.subr.mxu0 0.0
  %603 = vmatpush1.msra.mxu0 0.0
  %604 = vmatprep.subr.mxu0 0.0
  %605 = vmatpush1.msra.mxu0 0.0
  %606 = vmatprep.subr.mxu0 0.0
  %607 = vmatpush1.msra.mxu0 0.0
  %608 = vmatprep.subr.mxu0 0.0
  %609 = vmatpush1.msra.mxu0 0.0
  %610 = vmatprep.subr.mxu0 0.0
  %611 = vmatpush1.msra.mxu0 0.0
  %612 = vmatprep.subr.mxu0 0.0
  %613 = vmatpush1.msra.mxu0 0.0
  %614 = vmatprep.subr.mxu0 0.0
  %615 = vmatpush1.msra.mxu0 0.0
  %616 = vmatprep.subr.mxu0 0.0
  %617 = vmatpush1.msra.mxu0 0.0
  %618 = vmatprep.subr.mxu0 0.0
  %619 = vmatpush1.msra.mxu0 0.0
  %620 = vmatprep.subr.mxu0 0.0
  %621 = vmatpush1.msra.mxu0 0.0
  %622 = vmatprep.subr.mxu0 0.0
  %623 = vmatpush1.msra.mxu0 0.0
  %624 = vmatprep.subr.mxu0 0.0
  %625 = vmatpush1.msra.mxu0 0.0
  %626 = vmatprep.mubr.f32.mxu0 0.0
  %627 = vmatmul.mubr.f32.gmra.mrb[0].mxu0 %v560
  %v628 = vpop.f32.mrb[0].mxu0
  %v629 = vadd.f32 0.0, %v628
  %v630 = vpop.f32.mrb[0].mxu0
  %v631 = vadd.f32 0.0, %v630
  %632 = vdwg.mxu0
  %v633 = vadd.f32 %v629, %v318
  %v634 = vxor.u32 %v633, 2147483648
  %v635 = vmul.f32 %v634, 1.442695
  %v636 = vpow.pop %v635
  %v637 = vadd.f32 %v636, 1.0
  %v638 = vrcp.pop %v637
  %v639 = vmul.f32 1.0, %v638
  %v640 = vmul.f32 %v639, 2.0
  %v641 = vsub.f32 %v640, 1.0
  %v642 = vmul.f32 %v639, %v495
  %644 = vrot.lane.b32.xlu0 %v641, 64
  %v645 = vpop.permute.xlu0 %644
  %v647 = vmul.f32 %v639, %v645
  %649 = vrot.lane.b32.xlu0 %v647, 32
  %v650 = vpop.permute.xlu0 %649
  %v652 = vadd.f32 %v642, %v650
  %v653 = vtanh.pop %v652
  %655 = vrot.lane.b32.xlu0 %v653, 64
  %v656 = vpop.permute.xlu0 %655
  %v658 = vmul.f32 %v639, %v656
  %660 = vrot.lane.b32.xlu0 %v658, 32
  %v661 = vpop.permute.xlu0 %660
  %s663 = scalar_lea.vmem [#allocation3], 16
  %664 = vst.msk [vmem:[%s663] sm:$0xff] %vm221, %v661
  %v665 = vld [vmem:[#allocation2 + $0x18] sm:$0xff]
  %v666 = vadd.f32 %v665, %v631
  %v667 = vxor.u32 %v666, 2147483648
  %v668 = vmul.f32 %v667, 1.442695
  %v669 = vpow.pop %v668
  %v670 = vadd.f32 %v669, 1.0
  %v671 = vrcp.pop %v670
  %v672 = vmul.f32 1.0, %v671
  %v673 = vmul.f32 %v672, 2.0
  %v674 = vsub.f32 %v673, 1.0
  %v675 = vmul.f32 %v672, %v528
  %677 = vrot.lane.b32.xlu0 %v674, 64
  %v678 = vpop.permute.xlu0 %677
  %v680 = vmul.f32 %v672, %v678
  %682 = vrot.lane.b32.xlu0 %v680, 32
  %v683 = vpop.permute.xlu0 %682
  %v685 = vadd.f32 %v675, %v683
  %v686 = vtanh.pop %v685
  %688 = vrot.lane.b32.xlu0 %v686, 64
  %v689 = vpop.permute.xlu0 %688
  %v691 = vmul.f32 %v672, %v689
  %693 = vrot.lane.b32.xlu0 %v691, 32
  %v694 = vpop.permute.xlu0 %693
  %696 = vrot.lane.b32.xlu0 %v658, 64
  %v697 = vpop.permute.xlu0 %696
  %v699 = vsel %vm221, %v694, %v697
  %v700 = vld [vmem:[%s3] sm:$0xff]
  %v701 = vld [vmem:[%s3 + $0x8] sm:$0xff]
  %v702 = vld [vmem:[%s3 + $0x10] sm:$0xff]
  %v703 = vld [vmem:[%s3 + $0x18] sm:$0xff]
  %v704 = vld [vmem:[%s3 + $0x20] sm:$0xff]
  %v705 = vld [vmem:[%s3 + $0x28] sm:$0xff]
  %v706 = vld [vmem:[%s3 + $0x30] sm:$0xff]
  %v707 = vld [vmem:[%s3 + $0x38] sm:$0xff]
  %v708 = vld [vmem:[%s3 + $0x40] sm:$0xff]
  %v709 = vld [vmem:[%s3 + $0x48] sm:$0xff]
  %v710 = vld [vmem:[%s3 + $0x50] sm:$0xff]
  %v711 = vld [vmem:[%s3 + $0x58] sm:$0xff]
  %v712 = vld [vmem:[%s3 + $0x60] sm:$0xff]
  %v713 = vld [vmem:[%s3 + $0x68] sm:$0xff]
  %v714 = vld [vmem:[%s3 + $0x70] sm:$0xff]
  %v715 = vld [vmem:[%s3 + $0x78] sm:$0xff]
  %v717 = vsel %vm239, %v699, 0
  %719 = vmatprep.subr.mxu0 %v701
  %720 = vmatpush1.msra.mxu0 %v700
  %721 = vmatprep.subr.mxu0 %v703
  %722 = vmatpush1.msra.mxu0 %v702
  %723 = vmatprep.subr.mxu0 %v705
  %724 = vmatpush1.msra.mxu0 %v704
  %725 = vmatprep.subr.mxu0 %v707
  %726 = vmatpush1.msra.mxu0 %v706
  %727 = vmatprep.subr.mxu0 %v709
  %728 = vmatpush1.msra.mxu0 %v708
  %729 = vmatprep.subr.mxu0 %v711
  %730 = vmatpush1.msra.mxu0 %v710
  %731 = vmatprep.subr.mxu0 %v713
  %732 = vmatpush1.msra.mxu0 %v712
  %733 = vmatprep.subr.mxu0 %v715
  %734 = vmatpush1.msra.mxu0 %v714
  %735 = vmatprep.subr.mxu0 0.0
  %736 = vmatpush1.msra.mxu0 0.0
  %737 = vmatprep.subr.mxu0 0.0
  %738 = vmatpush1.msra.mxu0 0.0
  %739 = vmatprep.subr.mxu0 0.0
  %740 = vmatpush1.msra.mxu0 0.0
  %741 = vmatprep.subr.mxu0 0.0
  %742 = vmatpush1.msra.mxu0 0.0
  %743 = vmatprep.subr.mxu0 0.0
  %744 = vmatpush1.msra.mxu0 0.0
  %745 = vmatprep.subr.mxu0 0.0
  %746 = vmatpush1.msra.mxu0 0.0
  %747 = vmatprep.subr.mxu0 0.0
  %748 = vmatpush1.msra.mxu0 0.0
  %749 = vmatprep.subr.mxu0 0.0
  %750 = vmatpush1.msra.mxu0 0.0
  %751 = vmatprep.subr.mxu0 0.0
  %752 = vmatpush1.msra.mxu0 0.0
  %753 = vmatprep.subr.mxu0 0.0
  %754 = vmatpush1.msra.mxu0 0.0
  %755 = vmatprep.subr.mxu0 0.0
  %756 = vmatpush1.msra.mxu0 0.0
  %757 = vmatprep.subr.mxu0 0.0
  %758 = vmatpush1.msra.mxu0 0.0
  %759 = vmatprep.subr.mxu0 0.0
  %760 = vmatpush1.msra.mxu0 0.0
  %761 = vmatprep.subr.mxu0 0.0
  %762 = vmatpush1.msra.mxu0 0.0
  %763 = vmatprep.subr.mxu0 0.0
  %764 = vmatpush1.msra.mxu0 0.0
  %765 = vmatprep.subr.mxu0 0.0
  %766 = vmatpush1.msra.mxu0 0.0
  %767 = vmatprep.subr.mxu0 0.0
  %768 = vmatpush1.msra.mxu0 0.0
  %769 = vmatprep.subr.mxu0 0.0
  %770 = vmatpush1.msra.mxu0 0.0
  %771 = vmatprep.subr.mxu0 0.0
  %772 = vmatpush1.msra.mxu0 0.0
  %773 = vmatprep.subr.mxu0 0.0
  %774 = vmatpush1.msra.mxu0 0.0
  %775 = vmatprep.subr.mxu0 0.0
  %776 = vmatpush1.msra.mxu0 0.0
  %777 = vmatprep.subr.mxu0 0.0
  %778 = vmatpush1.msra.mxu0 0.0
  %779 = vmatprep.subr.mxu0 0.0
  %780 = vmatpush1.msra.mxu0 0.0
  %781 = vmatprep.subr.mxu0 0.0
  %782 = vmatpush1.msra.mxu0 0.0
  %783 = vmatprep.mubr.f32.mxu0 0.0
  %784 = vmatmul.mubr.f32.gmra.mrb[0].mxu0 %v717
  %v785 = vpop.f32.mrb[0].mxu0
  %v786 = vadd.f32 0.0, %v785
  %v787 = vpop.f32.mrb[0].mxu0
  %v788 = vadd.f32 0.0, %v787
  %789 = vdwg.mxu0
  %v790 = vadd.f32 %v786, %v318
  %v791 = vxor.u32 %v790, 2147483648
  %v792 = vmul.f32 %v791, 1.442695
  %v793 = vpow.pop %v792
  %v794 = vadd.f32 %v793, 1.0
  %v795 = vrcp.pop %v794
  %v796 = vmul.f32 1.0, %v795
  %v797 = vmul.f32 %v796, 2.0
  %v798 = vsub.f32 %v797, 1.0
  %v799 = vmul.f32 %v796, %v652
  %801 = vrot.lane.b32.xlu0 %v798, 64
  %v802 = vpop.permute.xlu0 %801
  %v804 = vmul.f32 %v796, %v802
  %806 = vrot.lane.b32.xlu0 %v804, 32
  %v807 = vpop.permute.xlu0 %806
  %v809 = vadd.f32 %v799, %v807
  %v810 = vtanh.pop %v809
  %812 = vrot.lane.b32.xlu0 %v810, 64
  %v813 = vpop.permute.xlu0 %812
  %v815 = vmul.f32 %v796, %v813
  %817 = vrot.lane.b32.xlu0 %v815, 32
  %v818 = vpop.permute.xlu0 %817
  %s820 = scalar_lea.vmem [#allocation3], 24
  %821 = vst.msk [vmem:[%s820] sm:$0xff] %vm221, %v818
  %v822 = vld [vmem:[#allocation2 + $0x20] sm:$0xff]
  %v823 = vadd.f32 %v822, %v788
  %v824 = vxor.u32 %v823, 2147483648
  %v825 = vmul.f32 %v824, 1.442695
  %v826 = vpow.pop %v825
  %v827 = vadd.f32 %v826, 1.0
  %v828 = vrcp.pop %v827
  %v829 = vmul.f32 1.0, %v828
  %v830 = vmul.f32 %v829, 2.0
  %v831 = vsub.f32 %v830, 1.0
  %v832 = vmul.f32 %v829, %v685
  %834 = vrot.lane.b32.xlu0 %v831, 64
  %v835 = vpop.permute.xlu0 %834
  %v837 = vmul.f32 %v829, %v835
  %839 = vrot.lane.b32.xlu0 %v837, 32
  %v840 = vpop.permute.xlu0 %839
  %v842 = vadd.f32 %v832, %v840
  %v843 = vtanh.pop %v842
  %845 = vrot.lane.b32.xlu0 %v843, 64
  %v846 = vpop.permute.xlu0 %845
  %v848 = vmul.f32 %v829, %v846
  %850 = vrot.lane.b32.xlu0 %v848, 32
  %v851 = vpop.permute.xlu0 %850
  %853 = vrot.lane.b32.xlu0 %v815, 64
  %v854 = vpop.permute.xlu0 %853
  %v856 = vsel %vm221, %v851, %v854
  %v857 = vld [vmem:[%s3] sm:$0xff]
  %v858 = vld [vmem:[%s3 + $0x8] sm:$0xff]
  %v859 = vld [vmem:[%s3 + $0x10] sm:$0xff]
  %v860 = vld [vmem:[%s3 + $0x18] sm:$0xff]
  %v861 = vld [vmem:[%s3 + $0x20] sm:$0xff]
  %v862 = vld [vmem:[%s3 + $0x28] sm:$0xff]
  %v863 = vld [vmem:[%s3 + $0x30] sm:$0xff]
  %v864 = vld [vmem:[%s3 + $0x38] sm:$0xff]
  %v865 = vld [vmem:[%s3 + $0x40] sm:$0xff]
  %v866 = vld [vmem:[%s3 + $0x48] sm:$0xff]
  %v867 = vld [vmem:[%s3 + $0x50] sm:$0xff]
  %v868 = vld [vmem:[%s3 + $0x58] sm:$0xff]
  %v869 = vld [vmem:[%s3 + $0x60] sm:$0xff]
  %v870 = vld [vmem:[%s3 + $0x68] sm:$0xff]
  %v871 = vld [vmem:[%s3 + $0x70] sm:$0xff]
  %v872 = vld [vmem:[%s3 + $0x78] sm:$0xff]
  %v874 = vsel %vm239, %v856, 0
  %876 = vmatprep.subr.mxu0 %v858
  %877 = vmatpush1.msra.mxu0 %v857
  %878 = vmatprep.subr.mxu0 %v860
  %879 = vmatpush1.msra.mxu0 %v859
  %880 = vmatprep.subr.mxu0 %v862
  %881 = vmatpush1.msra.mxu0 %v861
  %882 = vmatprep.subr.mxu0 %v864
  %883 = vmatpush1.msra.mxu0 %v863
  %884 = vmatprep.subr.mxu0 %v866
  %885 = vmatpush1.msra.mxu0 %v865
  %886 = vmatprep.subr.mxu0 %v868
  %887 = vmatpush1.msra.mxu0 %v867
  %888 = vmatprep.subr.mxu0 %v870
  %889 = vmatpush1.msra.mxu0 %v869
  %890 = vmatprep.subr.mxu0 %v872
  %891 = vmatpush1.msra.mxu0 %v871
  %892 = vmatprep.subr.mxu0 0.0
  %893 = vmatpush1.msra.mxu0 0.0
  %894 = vmatprep.subr.mxu0 0.0
  %895 = vmatpush1.msra.mxu0 0.0
  %896 = vmatprep.subr.mxu0 0.0
  %897 = vmatpush1.msra.mxu0 0.0
  %898 = vmatprep.subr.mxu0 0.0
  %899 = vmatpush1.msra.mxu0 0.0
  %900 = vmatprep.subr.mxu0 0.0
  %901 = vmatpush1.msra.mxu0 0.0
  %902 = vmatprep.subr.mxu0 0.0
  %903 = vmatpush1.msra.mxu0 0.0
  %904 = vmatprep.subr.mxu0 0.0
  %905 = vmatpush1.msra.mxu0 0.0
  %906 = vmatprep.subr.mxu0 0.0
  %907 = vmatpush1.msra.mxu0 0.0
  %908 = vmatprep.subr.mxu0 0.0
  %909 = vmatpush1.msra.mxu0 0.0
  %910 = vmatprep.subr.mxu0 0.0
  %911 = vmatpush1.msra.mxu0 0.0
  %912 = vmatprep.subr.mxu0 0.0
  %913 = vmatpush1.msra.mxu0 0.0
  %914 = vmatprep.subr.mxu0 0.0
  %915 = vmatpush1.msra.mxu0 0.0
  %916 = vmatprep.subr.mxu0 0.0
  %917 = vmatpush1.msra.mxu0 0.0
  %918 = vmatprep.subr.mxu0 0.0
  %919 = vmatpush1.msra.mxu0 0.0
  %920 = vmatprep.subr.mxu0 0.0
  %921 = vmatpush1.msra.mxu0 0.0
  %922 = vmatprep.subr.mxu0 0.0
  %923 = vmatpush1.msra.mxu0 0.0
  %924 = vmatprep.subr.mxu0 0.0
  %925 = vmatpush1.msra.mxu0 0.0
  %926 = vmatprep.subr.mxu0 0.0
  %927 = vmatpush1.msra.mxu0 0.0
  %928 = vmatprep.subr.mxu0 0.0
  %929 = vmatpush1.msra.mxu0 0.0
  %930 = vmatprep.subr.mxu0 0.0
  %931 = vmatpush1.msra.mxu0 0.0
  %932 = vmatprep.subr.mxu0 0.0
  %933 = vmatpush1.msra.mxu0 0.0
  %934 = vmatprep.subr.mxu0 0.0
  %935 = vmatpush1.msra.mxu0 0.0
  %936 = vmatprep.subr.mxu0 0.0
  %937 = vmatpush1.msra.mxu0 0.0
  %938 = vmatprep.subr.mxu0 0.0
  %939 = vmatpush1.msra.mxu0 0.0
  %940 = vmatprep.mubr.f32.mxu0 0.0
  %941 = vmatmul.mubr.f32.gmra.mrb[0].mxu0 %v874
  %v942 = vpop.f32.mrb[0].mxu0
  %v943 = vadd.f32 0.0, %v942
  %v944 = vpop.f32.mrb[0].mxu0
  %v945 = vadd.f32 0.0, %v944
  %946 = vdwg.mxu0
  %v947 = vadd.f32 %v943, %v318
  %v948 = vxor.u32 %v947, 2147483648
  %v949 = vmul.f32 %v948, 1.442695
  %v950 = vpow.pop %v949
  %v951 = vadd.f32 %v950, 1.0
  %v952 = vrcp.pop %v951
  %v953 = vmul.f32 1.0, %v952
  %v954 = vmul.f32 %v953, 2.0
  %v955 = vsub.f32 %v954, 1.0
  %v956 = vmul.f32 %v953, %v809
  %958 = vrot.lane.b32.xlu0 %v955, 64
  %v959 = vpop.permute.xlu0 %958
  %v961 = vmul.f32 %v953, %v959
  %963 = vrot.lane.b32.xlu0 %v961, 32
  %v964 = vpop.permute.xlu0 %963
  %v966 = vadd.f32 %v956, %v964
  %v967 = vtanh.pop %v966
  %969 = vrot.lane.b32.xlu0 %v967, 64
  %v970 = vpop.permute.xlu0 %969
  %v972 = vmul.f32 %v953, %v970
  %974 = vrot.lane.b32.xlu0 %v972, 32
  %v975 = vpop.permute.xlu0 %974
  %s977 = scalar_lea.vmem [#allocation3], 32
  %978 = vst.msk [vmem:[%s977] sm:$0xff] %vm221, %v975
  %v979 = vld [vmem:[#allocation2 + $0x28] sm:$0xff]
  %v980 = vadd.f32 %v979, %v945
  %v981 = vxor.u32 %v980, 2147483648
  %v982 = vmul.f32 %v981, 1.442695
  %v983 = vpow.pop %v982
  %v984 = vadd.f32 %v983, 1.0
  %v985 = vrcp.pop %v984
  %v986 = vmul.f32 1.0, %v985
  %v987 = vmul.f32 %v986, 2.0
  %v988 = vsub.f32 %v987, 1.0
  %v989 = vmul.f32 %v986, %v842
  %991 = vrot.lane.b32.xlu0 %v988, 64
  %v992 = vpop.permute.xlu0 %991
  %v994 = vmul.f32 %v986, %v992
  %996 = vrot.lane.b32.xlu0 %v994, 32
  %v997 = vpop.permute.xlu0 %996
  %v999 = vadd.f32 %v989, %v997
  %v1000 = vtanh.pop %v999
  %1002 = vrot.lane.b32.xlu0 %v1000, 64
  %v1003 = vpop.permute.xlu0 %1002
  %v1005 = vmul.f32 %v986, %v1003
  %1007 = vrot.lane.b32.xlu0 %v1005, 32
  %v1008 = vpop.permute.xlu0 %1007
  %1010 = vrot.lane.b32.xlu0 %v972, 64
  %v1011 = vpop.permute.xlu0 %1010
  %v1013 = vsel %vm221, %v1008, %v1011
  %v1014 = vld [vmem:[%s3] sm:$0xff]
  %v1015 = vld [vmem:[%s3 + $0x8] sm:$0xff]
  %v1016 = vld [vmem:[%s3 + $0x10] sm:$0xff]
  %v1017 = vld [vmem:[%s3 + $0x18] sm:$0xff]
  %v1018 = vld [vmem:[%s3 + $0x20] sm:$0xff]
  %v1019 = vld [vmem:[%s3 + $0x28] sm:$0xff]
  %v1020 = vld [vmem:[%s3 + $0x30] sm:$0xff]
  %v1021 = vld [vmem:[%s3 + $0x38] sm:$0xff]
  %v1022 = vld [vmem:[%s3 + $0x40] sm:$0xff]
  %v1023 = vld [vmem:[%s3 + $0x48] sm:$0xff]
  %v1024 = vld [vmem:[%s3 + $0x50] sm:$0xff]
  %v1025 = vld [vmem:[%s3 + $0x58] sm:$0xff]
  %v1026 = vld [vmem:[%s3 + $0x60] sm:$0xff]
  %v1027 = vld [vmem:[%s3 + $0x68] sm:$0xff]
  %v1028 = vld [vmem:[%s3 + $0x70] sm:$0xff]
  %v1029 = vld [vmem:[%s3 + $0x78] sm:$0xff]
  %v1031 = vsel %vm239, %v1013, 0
  %1033 = vmatprep.subr.mxu0 %v1015
  %1034 = vmatpush1.msra.mxu0 %v1014
  %1035 = vmatprep.subr.mxu0 %v1017
  %1036 = vmatpush1.msra.mxu0 %v1016
  %1037 = vmatprep.subr.mxu0 %v1019
  %1038 = vmatpush1.msra.mxu0 %v1018
  %1039 = vmatprep.subr.mxu0 %v1021
  %1040 = vmatpush1.msra.mxu0 %v1020
  %1041 = vmatprep.subr.mxu0 %v1023
  %1042 = vmatpush1.msra.mxu0 %v1022
  %1043 = vmatprep.subr.mxu0 %v1025
  %1044 = vmatpush1.msra.mxu0 %v1024
  %1045 = vmatprep.subr.mxu0 %v1027
  %1046 = vmatpush1.msra.mxu0 %v1026
  %1047 = vmatprep.subr.mxu0 %v1029
  %1048 = vmatpush1.msra.mxu0 %v1028
  %1049 = vmatprep.subr.mxu0 0.0
  %1050 = vmatpush1.msra.mxu0 0.0
  %1051 = vmatprep.subr.mxu0 0.0
  %1052 = vmatpush1.msra.mxu0 0.0
  %1053 = vmatprep.subr.mxu0 0.0
  %1054 = vmatpush1.msra.mxu0 0.0
  %1055 = vmatprep.subr.mxu0 0.0
  %1056 = vmatpush1.msra.mxu0 0.0
  %1057 = vmatprep.subr.mxu0 0.0
  %1058 = vmatpush1.msra.mxu0 0.0
  %1059 = vmatprep.subr.mxu0 0.0
  %1060 = vmatpush1.msra.mxu0 0.0
  %1061 = vmatprep.subr.mxu0 0.0
  %1062 = vmatpush1.msra.mxu0 0.0
  %1063 = vmatprep.subr.mxu0 0.0
  %1064 = vmatpush1.msra.mxu0 0.0
  %1065 = vmatprep.subr.mxu0 0.0
  %1066 = vmatpush1.msra.mxu0 0.0
  %1067 = vmatprep.subr.mxu0 0.0
  %1068 = vmatpush1.msra.mxu0 0.0
  %1069 = vmatprep.subr.mxu0 0.0
  %1070 = vmatpush1.msra.mxu0 0.0
  %1071 = vmatprep.subr.mxu0 0.0
  %1072 = vmatpush1.msra.mxu0 0.0
  %1073 = vmatprep.subr.mxu0 0.0
  %1074 = vmatpush1.msra.mxu0 0.0
  %1075 = vmatprep.subr.mxu0 0.0
  %1076 = vmatpush1.msra.mxu0 0.0
  %1077 = vmatprep.subr.mxu0 0.0
  %1078 = vmatpush1.msra.mxu0 0.0
  %1079 = vmatprep.subr.mxu0 0.0
  %1080 = vmatpush1.msra.mxu0 0.0
  %1081 = vmatprep.subr.mxu0 0.0
  %1082 = vmatpush1.msra.mxu0 0.0
  %1083 = vmatprep.subr.mxu0 0.0
  %1084 = vmatpush1.msra.mxu0 0.0
  %1085 = vmatprep.subr.mxu0 0.0
  %1086 = vmatpush1.msra.mxu0 0.0
  %1087 = vmatprep.subr.mxu0 0.0
  %1088 = vmatpush1.msra.mxu0 0.0
  %1089 = vmatprep.subr.mxu0 0.0
  %1090 = vmatpush1.msra.mxu0 0.0
  %1091 = vmatprep.subr.mxu0 0.0
  %1092 = vmatpush1.msra.mxu0 0.0
  %1093 = vmatprep.subr.mxu0 0.0
  %1094 = vmatpush1.msra.mxu0 0.0
  %1095 = vmatprep.subr.mxu0 0.0
  %1096 = vmatpush1.msra.mxu0 0.0
  %1097 = vmatprep.mubr.f32.mxu0 0.0
  %1098 = vmatmul.mubr.f32.gmra.mrb[0].mxu0 %v1031
  %v1099 = vpop.f32.mrb[0].mxu0
  %v1100 = vadd.f32 0.0, %v1099
  %v1101 = vpop.f32.mrb[0].mxu0
  %v1102 = vadd.f32 0.0, %v1101
  %1103 = vdwg.mxu0
  %v1104 = vadd.f32 %v1100, %v318
  %v1105 = vxor.u32 %v1104, 2147483648
  %v1106 = vmul.f32 %v1105, 1.442695
  %v1107 = vpow.pop %v1106
  %v1108 = vadd.f32 %v1107, 1.0
  %v1109 = vrcp.pop %v1108
  %v1110 = vmul.f32 1.0, %v1109
  %v1111 = vmul.f32 %v1110, 2.0
  %v1112 = vsub.f32 %v1111, 1.0
  %v1113 = vmul.f32 %v1110, %v966
  %1115 = vrot.lane.b32.xlu0 %v1112, 64
  %v1116 = vpop.permute.xlu0 %1115
  %v1118 = vmul.f32 %v1110, %v1116
  %1120 = vrot.lane.b32.xlu0 %v1118, 32
  %v1121 = vpop.permute.xlu0 %1120
  %v1123 = vadd.f32 %v1113, %v1121
  %v1124 = vtanh.pop %v1123
  %1126 = vrot.lane.b32.xlu0 %v1124, 64
  %v1127 = vpop.permute.xlu0 %1126
  %v1129 = vmul.f32 %v1110, %v1127
  %1131 = vrot.lane.b32.xlu0 %v1129, 32
  %v1132 = vpop.permute.xlu0 %1131
  %s1134 = scalar_lea.vmem [#allocation3], 40
  %1135 = vst.msk [vmem:[%s1134] sm:$0xff] %vm221, %v1132
  %v1136 = vld [vmem:[#allocation2 + $0x30] sm:$0xff]
  %v1137 = vadd.f32 %v1136, %v1102
  %v1138 = vxor.u32 %v1137, 2147483648
  %v1139 = vmul.f32 %v1138, 1.442695
  %v1140 = vpow.pop %v1139
  %v1141 = vadd.f32 %v1140, 1.0
  %v1142 = vrcp.pop %v1141
  %v1143 = vmul.f32 1.0, %v1142
  %v1144 = vmul.f32 %v1143, 2.0
  %v1145 = vsub.f32 %v1144, 1.0
  %v1146 = vmul.f32 %v1143, %v999
  %1148 = vrot.lane.b32.xlu0 %v1145, 64
  %v1149 = vpop.permute.xlu0 %1148
  %v1151 = vmul.f32 %v1143, %v1149
  %1153 = vrot.lane.b32.xlu0 %v1151, 32
  %v1154 = vpop.permute.xlu0 %1153
  %v1156 = vadd.f32 %v1146, %v1154
  %v1157 = vtanh.pop %v1156
  %1159 = vrot.lane.b32.xlu0 %v1157, 64
  %v1160 = vpop.permute.xlu0 %1159
  %v1162 = vmul.f32 %v1143, %v1160
  %1164 = vrot.lane.b32.xlu0 %v1162, 32
  %v1165 = vpop.permute.xlu0 %1164
  %1167 = vrot.lane.b32.xlu0 %v1129, 64
  %v1168 = vpop.permute.xlu0 %1167
  %v1170 = vsel %vm221, %v1165, %v1168
  %v1171 = vld [vmem:[%s3] sm:$0xff]
  %v1172 = vld [vmem:[%s3 + $0x8] sm:$0xff]
  %v1173 = vld [vmem:[%s3 + $0x10] sm:$0xff]
  %v1174 = vld [vmem:[%s3 + $0x18] sm:$0xff]
  %v1175 = vld [vmem:[%s3 + $0x20] sm:$0xff]
  %v1176 = vld [vmem:[%s3 + $0x28] sm:$0xff]
  %v1177 = vld [vmem:[%s3 + $0x30] sm:$0xff]
  %v1178 = vld [vmem:[%s3 + $0x38] sm:$0xff]
  %v1179 = vld [vmem:[%s3 + $0x40] sm:$0xff]
  %v1180 = vld [vmem:[%s3 + $0x48] sm:$0xff]
  %v1181 = vld [vmem:[%s3 + $0x50] sm:$0xff]
  %v1182 = vld [vmem:[%s3 + $0x58] sm:$0xff]
  %v1183 = vld [vmem:[%s3 + $0x60] sm:$0xff]
  %v1184 = vld [vmem:[%s3 + $0x68] sm:$0xff]
  %v1185 = vld [vmem:[%s3 + $0x70] sm:$0xff]
  %v1186 = vld [vmem:[%s3 + $0x78] sm:$0xff]
  %v1188 = vsel %vm239, %v1170, 0
  %1190 = vmatprep.subr.mxu0 %v1172
  %1191 = vmatpush1.msra.mxu0 %v1171
  %1192 = vmatprep.subr.mxu0 %v1174
  %1193 = vmatpush1.msra.mxu0 %v1173
  %1194 = vmatprep.subr.mxu0 %v1176
  %1195 = vmatpush1.msra.mxu0 %v1175
  %1196 = vmatprep.subr.mxu0 %v1178
  %1197 = vmatpush1.msra.mxu0 %v1177
  %1198 = vmatprep.subr.mxu0 %v1180
  %1199 = vmatpush1.msra.mxu0 %v1179
  %1200 = vmatprep.subr.mxu0 %v1182
  %1201 = vmatpush1.msra.mxu0 %v1181
  %1202 = vmatprep.subr.mxu0 %v1184
  %1203 = vmatpush1.msra.mxu0 %v1183
  %1204 = vmatprep.subr.mxu0 %v1186
  %1205 = vmatpush1.msra.mxu0 %v1185
  %1206 = vmatprep.subr.mxu0 0.0
  %1207 = vmatpush1.msra.mxu0 0.0
  %1208 = vmatprep.subr.mxu0 0.0
  %1209 = vmatpush1.msra.mxu0 0.0
  %1210 = vmatprep.subr.mxu0 0.0
  %1211 = vmatpush1.msra.mxu0 0.0
  %1212 = vmatprep.subr.mxu0 0.0
  %1213 = vmatpush1.msra.mxu0 0.0
  %1214 = vmatprep.subr.mxu0 0.0
  %1215 = vmatpush1.msra.mxu0 0.0
  %1216 = vmatprep.subr.mxu0 0.0
  %1217 = vmatpush1.msra.mxu0 0.0
  %1218 = vmatprep.subr.mxu0 0.0
  %1219 = vmatpush1.msra.mxu0 0.0
  %1220 = vmatprep.subr.mxu0 0.0
  %1221 = vmatpush1.msra.mxu0 0.0
  %1222 = vmatprep.subr.mxu0 0.0
  %1223 = vmatpush1.msra.mxu0 0.0
  %1224 = vmatprep.subr.mxu0 0.0
  %1225 = vmatpush1.msra.mxu0 0.0
  %1226 = vmatprep.subr.mxu0 0.0
  %1227 = vmatpush1.msra.mxu0 0.0
  %1228 = vmatprep.subr.mxu0 0.0
  %1229 = vmatpush1.msra.mxu0 0.0
  %1230 = vmatprep.subr.mxu0 0.0
  %1231 = vmatpush1.msra.mxu0 0.0
  %1232 = vmatprep.subr.mxu0 0.0
  %1233 = vmatpush1.msra.mxu0 0.0
  %1234 = vmatprep.subr.mxu0 0.0
  %1235 = vmatpush1.msra.mxu0 0.0
  %1236 = vmatprep.subr.mxu0 0.0
  %1237 = vmatpush1.msra.mxu0 0.0
  %1238 = vmatprep.subr.mxu0 0.0
  %1239 = vmatpush1.msra.mxu0 0.0
  %1240 = vmatprep.subr.mxu0 0.0
  %1241 = vmatpush1.msra.mxu0 0.0
  %1242 = vmatprep.subr.mxu0 0.0
  %1243 = vmatpush1.msra.mxu0 0.0
  %1244 = vmatprep.subr.mxu0 0.0
  %1245 = vmatpush1.msra.mxu0 0.0
  %1246 = vmatprep.subr.mxu0 0.0
  %1247 = vmatpush1.msra.mxu0 0.0
  %1248 = vmatprep.subr.mxu0 0.0
  %1249 = vmatpush1.msra.mxu0 0.0
  %1250 = vmatprep.subr.mxu0 0.0
  %1251 = vmatpush1.msra.mxu0 0.0
  %1252 = vmatprep.subr.mxu0 0.0
  %1253 = vmatpush1.msra.mxu0 0.0
  %1254 = vmatprep.mubr.f32.mxu0 0.0
  %1255 = vmatmul.mubr.f32.gmra.mrb[0].mxu0 %v1188
  %v1256 = vpop.f32.mrb[0].mxu0
  %v1257 = vadd.f32 0.0, %v1256
  %v1258 = vpop.f32.mrb[0].mxu0
  %v1259 = vadd.f32 0.0, %v1258
  %1260 = vdwg.mxu0
  %v1261 = vadd.f32 %v1257, %v318
  %v1262 = vxor.u32 %v1261, 2147483648
  %v1263 = vmul.f32 %v1262, 1.442695
  %v1264 = vpow.pop %v1263
  %v1265 = vadd.f32 %v1264, 1.0
  %v1266 = vrcp.pop %v1265
  %v1267 = vmul.f32 1.0, %v1266
  %v1268 = vmul.f32 %v1267, 2.0
  %v1269 = vsub.f32 %v1268, 1.0
  %v1270 = vmul.f32 %v1267, %v1123
  %1272 = vrot.lane.b32.xlu0 %v1269, 64
  %v1273 = vpop.permute.xlu0 %1272
  %v1275 = vmul.f32 %v1267, %v1273
  %1277 = vrot.lane.b32.xlu0 %v1275, 32
  %v1278 = vpop.permute.xlu0 %1277
  %v1280 = vadd.f32 %v1270, %v1278
  %v1281 = vtanh.pop %v1280
  %1283 = vrot.lane.b32.xlu0 %v1281, 64
  %v1284 = vpop.permute.xlu0 %1283
  %v1286 = vmul.f32 %v1267, %v1284
  %1288 = vrot.lane.b32.xlu0 %v1286, 32
  %v1289 = vpop.permute.xlu0 %1288
  %s1291 = scalar_lea.vmem [#allocation3], 48
  %1292 = vst.msk [vmem:[%s1291] sm:$0xff] %vm221, %v1289
  %v1293 = vld [vmem:[#allocation2 + $0x38] sm:$0xff]
  %v1294 = vadd.f32 %v1293, %v1259
  %v1295 = vxor.u32 %v1294, 2147483648
  %v1296 = vmul.f32 %v1295, 1.442695
  %v1297 = vpow.pop %v1296
  %v1298 = vadd.f32 %v1297, 1.0
  %v1299 = vrcp.pop %v1298
  %v1300 = vmul.f32 1.0, %v1299
  %v1301 = vmul.f32 %v1300, 2.0
  %v1302 = vsub.f32 %v1301, 1.0
  %v1303 = vmul.f32 %v1300, %v1156
  %1305 = vrot.lane.b32.xlu0 %v1302, 64
  %v1306 = vpop.permute.xlu0 %1305
  %v1308 = vmul.f32 %v1300, %v1306
  %1310 = vrot.lane.b32.xlu0 %v1308, 32
  %v1311 = vpop.permute.xlu0 %1310
  %v1313 = vadd.f32 %v1303, %v1311
  %v1314 = vtanh.pop %v1313
  %1316 = vrot.lane.b32.xlu0 %v1314, 64
  %v1317 = vpop.permute.xlu0 %1316
  %v1319 = vmul.f32 %v1300, %v1317
  %1321 = vrot.lane.b32.xlu0 %v1319, 32
  %v1322 = vpop.permute.xlu0 %1321
  %1324 = vrot.lane.b32.xlu0 %v1286, 64
  %v1325 = vpop.permute.xlu0 %1324
  %v1327 = vsel %vm221, %v1322, %v1325
  %v1328 = vld [vmem:[%s3] sm:$0xff]
  %v1329 = vld [vmem:[%s3 + $0x8] sm:$0xff]
  %v1330 = vld [vmem:[%s3 + $0x10] sm:$0xff]
  %v1331 = vld [vmem:[%s3 + $0x18] sm:$0xff]
  %v1332 = vld [vmem:[%s3 + $0x20] sm:$0xff]
  %v1333 = vld [vmem:[%s3 + $0x28] sm:$0xff]
  %v1334 = vld [vmem:[%s3 + $0x30] sm:$0xff]
  %v1335 = vld [vmem:[%s3 + $0x38] sm:$0xff]
  %v1336 = vld [vmem:[%s3 + $0x40] sm:$0xff]
  %v1337 = vld [vmem:[%s3 + $0x48] sm:$0xff]
  %v1338 = vld [vmem:[%s3 + $0x50] sm:$0xff]
  %v1339 = vld [vmem:[%s3 + $0x58] sm:$0xff]
  %v1340 = vld [vmem:[%s3 + $0x60] sm:$0xff]
  %v1341 = vld [vmem:[%s3 + $0x68] sm:$0xff]
  %v1342 = vld [vmem:[%s3 + $0x70] sm:$0xff]
  %v1343 = vld [vmem:[%s3 + $0x78] sm:$0xff]
  %v1345 = vsel %vm239, %v1327, 0
  %1347 = vmatprep.subr.mxu0 %v1329
  %1348 = vmatpush1.msra.mxu0 %v1328
  %1349 = vmatprep.subr.mxu0 %v1331
  %1350 = vmatpush1.msra.mxu0 %v1330
  %1351 = vmatprep.subr.mxu0 %v1333
  %1352 = vmatpush1.msra.mxu0 %v1332
  %1353 = vmatprep.subr.mxu0 %v1335
  %1354 = vmatpush1.msra.mxu0 %v1334
  %1355 = vmatprep.subr.mxu0 %v1337
  %1356 = vmatpush1.msra.mxu0 %v1336
  %1357 = vmatprep.subr.mxu0 %v1339
  %1358 = vmatpush1.msra.mxu0 %v1338
  %1359 = vmatprep.subr.mxu0 %v1341
  %1360 = vmatpush1.msra.mxu0 %v1340
  %1361 = vmatprep.subr.mxu0 %v1343
  %1362 = vmatpush1.msra.mxu0 %v1342
  %1363 = vmatprep.subr.mxu0 0.0
  %1364 = vmatpush1.msra.mxu0 0.0
  %1365 = vmatprep.subr.mxu0 0.0
  %1366 = vmatpush1.msra.mxu0 0.0
  %1367 = vmatprep.subr.mxu0 0.0
  %1368 = vmatpush1.msra.mxu0 0.0
  %1369 = vmatprep.subr.mxu0 0.0
  %1370 = vmatpush1.msra.mxu0 0.0
  %1371 = vmatprep.subr.mxu0 0.0
  %1372 = vmatpush1.msra.mxu0 0.0
  %1373 = vmatprep.subr.mxu0 0.0
  %1374 = vmatpush1.msra.mxu0 0.0
  %1375 = vmatprep.subr.mxu0 0.0
  %1376 = vmatpush1.msra.mxu0 0.0
  %1377 = vmatprep.subr.mxu0 0.0
  %1378 = vmatpush1.msra.mxu0 0.0
  %1379 = vmatprep.subr.mxu0 0.0
  %1380 = vmatpush1.msra.mxu0 0.0
  %1381 = vmatprep.subr.mxu0 0.0
  %1382 = vmatpush1.msra.mxu0 0.0
  %1383 = vmatprep.subr.mxu0 0.0
  %1384 = vmatpush1.msra.mxu0 0.0
  %1385 = vmatprep.subr.mxu0 0.0
  %1386 = vmatpush1.msra.mxu0 0.0
  %1387 = vmatprep.subr.mxu0 0.0
  %1388 = vmatpush1.msra.mxu0 0.0
  %1389 = vmatprep.subr.mxu0 0.0
  %1390 = vmatpush1.msra.mxu0 0.0
  %1391 = vmatprep.subr.mxu0 0.0
  %1392 = vmatpush1.msra.mxu0 0.0
  %1393 = vmatprep.subr.mxu0 0.0
  %1394 = vmatpush1.msra.mxu0 0.0
  %1395 = vmatprep.subr.mxu0 0.0
  %1396 = vmatpush1.msra.mxu0 0.0
  %1397 = vmatprep.subr.mxu0 0.0
  %1398 = vmatpush1.msra.mxu0 0.0
  %1399 = vmatprep.subr.mxu0 0.0
  %1400 = vmatpush1.msra.mxu0 0.0
  %1401 = vmatprep.subr.mxu0 0.0
  %1402 = vmatpush1.msra.mxu0 0.0
  %1403 = vmatprep.subr.mxu0 0.0
  %1404 = vmatpush1.msra.mxu0 0.0
  %1405 = vmatprep.subr.mxu0 0.0
  %1406 = vmatpush1.msra.mxu0 0.0
  %1407 = vmatprep.subr.mxu0 0.0
  %1408 = vmatpush1.msra.mxu0 0.0
  %1409 = vmatprep.subr.mxu0 0.0
  %1410 = vmatpush1.msra.mxu0 0.0
  %1411 = vmatprep.mubr.f32.mxu0 0.0
  %1412 = vmatmul.mubr.f32.gmra.mrb[0].mxu0 %v1345
  %v1413 = vpop.f32.mrb[0].mxu0
  %v1414 = vadd.f32 0.0, %v1413
  %v1415 = vpop.f32.mrb[0].mxu0
  %1416 = vdwg.mxu0
  %v1417 = vadd.f32 %v1414, %v318
  %v1418 = vxor.u32 %v1417, 2147483648
  %v1419 = vmul.f32 %v1418, 1.442695
  %v1420 = vpow.pop %v1419
  %v1421 = vadd.f32 %v1420, 1.0
  %v1422 = vrcp.pop %v1421
  %v1423 = vmul.f32 1.0, %v1422
  %v1424 = vmul.f32 %v1423, 2.0
  %v1425 = vsub.f32 %v1424, 1.0
  %v1426 = vmul.f32 %v1423, %v1280
  %1428 = vrot.lane.b32.xlu0 %v1425, 64
  %v1429 = vpop.permute.xlu0 %1428
  %v1431 = vmul.f32 %v1423, %v1429
  %1433 = vrot.lane.b32.xlu0 %v1431, 32
  %v1434 = vpop.permute.xlu0 %1433
  %v1436 = vadd.f32 %v1426, %v1434
  %v1437 = vtanh.pop %v1436
  %1439 = vrot.lane.b32.xlu0 %v1437, 64
  %v1440 = vpop.permute.xlu0 %1439
  %v1442 = vmul.f32 %v1423, %v1440
  %1444 = vrot.lane.b32.xlu0 %v1442, 32
  %v1445 = vpop.permute.xlu0 %1444
  %s1447 = scalar_lea.vmem [#allocation3], 56
  %1448 = vst.msk [vmem:[%s1447] sm:$0xff] %vm221, %v1445
  %v1449 = vld [vmem:[#allocation3] sm:$0xff]
  %v1450 = vld [vmem:[#allocation3 + $0x8] sm:$0xff]
  %v1451 = vld [vmem:[#allocation3 + $0x10] sm:$0xff]
  %v1452 = vld [vmem:[#allocation3 + $0x18] sm:$0xff]
  %v1453 = vld [vmem:[#allocation3 + $0x20] sm:$0xff]
  %v1454 = vld [vmem:[#allocation3 + $0x28] sm:$0xff]
  %v1455 = vld [vmem:[#allocation3 + $0x30] sm:$0xff]
  %v1456 = vld [vmem:[#allocation3 + $0x38] sm:$0xff]
  %v1457 = vmax.f32 %v1449, %v1450
  %v1458 = vmax.f32 %v1451, %v1452
  %v1459 = vmax.f32 %v1457, %v1458
  %v1460 = vmax.f32 %v1453, %v1454
  %v1461 = vmax.f32 %v1455, %v1456
  %v1462 = vmax.f32 %v1460, %v1461
  %v1463 = vmax.f32 %v1459, %v1462
  %v1464 = vsub.f32 %v1449, %v1463
  %v1465 = vsub.f32 %v1450, %v1463
  %v1466 = vsub.f32 %v1451, %v1463
  %v1467 = vsub.f32 %v1452, %v1463
  %v1468 = vsub.f32 %v1453, %v1463
  %v1469 = vsub.f32 %v1454, %v1463
  %v1470 = vsub.f32 %v1455, %v1463
  %v1471 = vsub.f32 %v1456, %v1463
  %v1472 = vmul.f32 %v1464, 1.442695
  %v1473 = vpow.pop %v1472
  %v1474 = vmul.f32 %v1465, 1.442695
  %v1475 = vpow.pop %v1474
  %v1476 = vmul.f32 %v1466, 1.442695
  %v1477 = vpow.pop %v1476
  %v1478 = vmul.f32 %v1467, 1.442695
  %v1479 = vpow.pop %v1478
  %v1480 = vmul.f32 %v1468, 1.442695
  %v1481 = vpow.pop %v1480
  %v1482 = vmul.f32 %v1469, 1.442695
  %v1483 = vpow.pop %v1482
  %v1484 = vmul.f32 %v1470, 1.442695
  %v1485 = vpow.pop %v1484
  %v1486 = vmul.f32 %v1471, 1.442695
  %v1487 = vpow.pop %v1486
  %v1488 = vadd.f32 %v1473, %v1475
  %v1489 = vadd.f32 %v1477, %v1479
  %v1490 = vadd.f32 %v1488, %v1489
  %v1491 = vadd.f32 %v1481, %v1483
  %v1492 = vadd.f32 %v1485, %v1487
  %v1493 = vadd.f32 %v1491, %v1492
  %v1494 = vadd.f32 %v1490, %v1493
  %v1495 = vrcp.pop %v1494
  %v1496 = vmul.f32 %v1473, %v1495
  %v1497 = vmul.f32 %v1475, %v1495
  %v1498 = vmul.f32 %v1477, %v1495
  %v1499 = vmul.f32 %v1479, %v1495
  %v1500 = vmul.f32 %v1481, %v1495
  %v1501 = vmul.f32 %v1483, %v1495
  %v1502 = vmul.f32 %v1485, %v1495
  %v1503 = vmul.f32 %v1487, %v1495
  %v1504 = vld [vmem:[%s5] sm:$0xff]
  %v1505 = vld [vmem:[%s5 + $0x8] sm:$0xff]
  %v1506 = vld [vmem:[%s5 + $0x10] sm:$0xff]
  %v1507 = vld [vmem:[%s5 + $0x18] sm:$0xff]
  %v1508 = vld [vmem:[%s6] sm:$0x1]
  %v1510 = vlaneseq
  %v1511 = vshrl.u32 %v1510, 7
  %v1512 = vsub.s32 0, %v1511
  %v1513 = vrot.slane %v1508, %v1512
  %v1516 = vsel %vm221, %v1496, 0
  %v1519 = vsel %vm221, %v1497, 0
  %v1522 = vsel %vm221, %v1498, 0
  %v1525 = vsel %vm221, %v1499, 0
  %v1528 = vsel %vm221, %v1500, 0
  %v1531 = vsel %vm221, %v1501, 0
  %v1534 = vsel %vm221, %v1502, 0
  %v1537 = vsel %vm221, %v1503, 0
  %1539 = vmatprep.subr.mxu0 0.0
  %1540 = vmatpush1.msra.mxu0 %v1504
  %1541 = vmatprep.subr.mxu0 0.0
  %1542 = vmatpush1.msra.mxu0 %v1505
  %1543 = vmatprep.subr.mxu0 0.0
  %1544 = vmatpush1.msra.mxu0 %v1506
  %1545 = vmatprep.subr.mxu0 0.0
  %1546 = vmatpush1.msra.mxu0 %v1507
  %1547 = vmatprep.subr.mxu0 0.0
  %1548 = vmatpush1.msra.mxu0 0.0
  %1549 = vmatprep.subr.mxu0 0.0
  %1550 = vmatpush1.msra.mxu0 0.0
  %1551 = vmatprep.subr.mxu0 0.0
  %1552 = vmatpush1.msra.mxu0 0.0
  %1553 = vmatprep.subr.mxu0 0.0
  %1554 = vmatpush1.msra.mxu0 0.0
  %1555 = vmatprep.subr.mxu0 0.0
  %1556 = vmatpush1.msra.mxu0 0.0
  %1557 = vmatprep.subr.mxu0 0.0
  %1558 = vmatpush1.msra.mxu0 0.0
  %1559 = vmatprep.subr.mxu0 0.0
  %1560 = vmatpush1.msra.mxu0 0.0
  %1561 = vmatprep.subr.mxu0 0.0
  %1562 = vmatpush1.msra.mxu0 0.0
  %1563 = vmatprep.subr.mxu0 0.0
  %1564 = vmatpush1.msra.mxu0 0.0
  %1565 = vmatprep.subr.mxu0 0.0
  %1566 = vmatpush1.msra.mxu0 0.0
  %1567 = vmatprep.subr.mxu0 0.0
  %1568 = vmatpush1.msra.mxu0 0.0
  %1569 = vmatprep.subr.mxu0 0.0
  %1570 = vmatpush1.msra.mxu0 0.0
  %1571 = vmatprep.subr.mxu0 0.0
  %1572 = vmatpush1.msra.mxu0 0.0
  %1573 = vmatprep.subr.mxu0 0.0
  %1574 = vmatpush1.msra.mxu0 0.0
  %1575 = vmatprep.subr.mxu0 0.0
  %1576 = vmatpush1.msra.mxu0 0.0
  %1577 = vmatprep.subr.mxu0 0.0
  %1578 = vmatpush1.msra.mxu0 0.0
  %1579 = vmatprep.subr.mxu0 0.0
  %1580 = vmatpush1.msra.mxu0 0.0
  %1581 = vmatprep.subr.mxu0 0.0
  %1582 = vmatpush1.msra.mxu0 0.0
  %1583 = vmatprep.subr.mxu0 0.0
  %1584 = vmatpush1.msra.mxu0 0.0
  %1585 = vmatprep.subr.mxu0 0.0
  %1586 = vmatpush1.msra.mxu0 0.0
  %1587 = vmatprep.subr.mxu0 0.0
  %1588 = vmatpush1.msra.mxu0 0.0
  %1589 = vmatprep.subr.mxu0 0.0
  %1590 = vmatpush1.msra.mxu0 0.0
  %1591 = vmatprep.subr.mxu0 0.0
  %1592 = vmatpush1.msra.mxu0 0.0
  %1593 = vmatprep.subr.mxu0 0.0
  %1594 = vmatpush1.msra.mxu0 0.0
  %1595 = vmatprep.subr.mxu0 0.0
  %1596 = vmatpush1.msra.mxu0 0.0
  %1597 = vmatprep.subr.mxu0 0.0
  %1598 = vmatpush1.msra.mxu0 0.0
  %1599 = vmatprep.subr.mxu0 0.0
  %1600 = vmatpush1.msra.mxu0 0.0
  %1601 = vmatprep.subr.mxu0 0.0
  %1602 = vmatpush1.msra.mxu0 0.0
  %1603 = vmatprep.mubr.f32.mxu0 0.0
  %1604 = vmatmul.mubr.f32.gmra.mrb[0].mxu0 %v1516
  %v1605 = vpop.f32.mrb[0].mxu0
  %v1606 = vadd.f32 %v1513, %v1605
  %v1607 = vpop.f32.mrb[0].mxu0
  %1608 = vmatprep.mubr.f32.mxu0 0.0
  %1609 = vmatmul.mubr.f32.gmra.mrb[0].mxu0 %v1519
  %v1610 = vpop.f32.mrb[0].mxu0
  %v1611 = vadd.f32 %v1513, %v1610
  %v1612 = vpop.f32.mrb[0].mxu0
  %1613 = vmatprep.mubr.f32.mxu0 0.0
  %1614 = vmatmul.mubr.f32.gmra.mrb[0].mxu0 %v1522
  %v1615 = vpop.f32.mrb[0].mxu0
  %v1616 = vadd.f32 %v1513, %v1615
  %v1617 = vpop.f32.mrb[0].mxu0
  %1618 = vmatprep.mubr.f32.mxu0 0.0
  %1619 = vmatmul.mubr.f32.gmra.mrb[0].mxu0 %v1525
  %v1620 = vpop.f32.mrb[0].mxu0
  %v1621 = vadd.f32 %v1513, %v1620
  %v1622 = vpop.f32.mrb[0].mxu0
  %1623 = vmatprep.mubr.f32.mxu0 0.0
  %1624 = vmatmul.mubr.f32.gmra.mrb[0].mxu0 %v1528
  %v1625 = vpop.f32.mrb[0].mxu0
  %v1626 = vadd.f32 %v1513, %v1625
  %v1627 = vpop.f32.mrb[0].mxu0
  %1628 = vmatprep.mubr.f32.mxu0 0.0
  %1629 = vmatmul.mubr.f32.gmra.mrb[0].mxu0 %v1531
  %v1630 = vpop.f32.mrb[0].mxu0
  %v1631 = vadd.f32 %v1513, %v1630
  %v1632 = vpop.f32.mrb[0].mxu0
  %1633 = vmatprep.mubr.f32.mxu0 0.0
  %1634 = vmatmul.mubr.f32.gmra.mrb[0].mxu0 %v1534
  %v1635 = vpop.f32.mrb[0].mxu0
  %v1636 = vadd.f32 %v1513, %v1635
  %v1637 = vpop.f32.mrb[0].mxu0
  %1638 = vmatprep.mubr.f32.mxu0 0.0
  %1639 = vmatmul.mubr.f32.gmra.mrb[0].mxu0 %v1537
  %v1640 = vpop.f32.mrb[0].mxu0
  %v1641 = vadd.f32 %v1513, %v1640
  %v1642 = vpop.f32.mrb[0].mxu0
  %1643 = vdwg.mxu0
  %v1644 = vmax.f32 %v1606, %v1611
  %v1645 = vmax.f32 %v1616, %v1621
  %v1646 = vmax.f32 %v1644, %v1645
  %v1647 = vmax.f32 %v1626, %v1631
  %v1648 = vmax.f32 %v1636, %v1641
  %v1649 = vmax.f32 %v1647, %v1648
  %v1650 = vmax.f32 %v1646, %v1649
  %v1651 = vsub.f32 %v1606, %v1650
  %v1652 = vsub.f32 %v1611, %v1650
  %v1653 = vsub.f32 %v1616, %v1650
  %v1654 = vsub.f32 %v1621, %v1650
  %v1655 = vsub.f32 %v1626, %v1650
  %v1656 = vsub.f32 %v1631, %v1650
  %v1657 = vsub.f32 %v1636, %v1650
  %v1658 = vsub.f32 %v1641, %v1650
  %v1659 = vmul.f32 %v1651, 1.442695
  %v1660 = vpow.pop %v1659
  %v1661 = vmul.f32 %v1652, 1.442695
  %v1662 = vpow.pop %v1661
  %v1663 = vmul.f32 %v1653, 1.442695
  %v1664 = vpow.pop %v1663
  %v1665 = vmul.f32 %v1654, 1.442695
  %v1666 = vpow.pop %v1665
  %v1667 = vmul.f32 %v1655, 1.442695
  %v1668 = vpow.pop %v1667
  %v1669 = vmul.f32 %v1656, 1.442695
  %v1670 = vpow.pop %v1669
  %v1671 = vmul.f32 %v1657, 1.442695
  %v1672 = vpow.pop %v1671
  %v1673 = vmul.f32 %v1658, 1.442695
  %v1674 = vpow.pop %v1673
  %v1675 = vadd.f32 %v1660, %v1662
  %v1676 = vadd.f32 %v1664, %v1666
  %v1677 = vadd.f32 %v1675, %v1676
  %v1678 = vadd.f32 %v1668, %v1670
  %v1679 = vadd.f32 %v1672, %v1674
  %v1680 = vadd.f32 %v1678, %v1679
  %v1681 = vadd.f32 %v1677, %v1680
  %v1682 = vrcp.pop %v1681
  %v1683 = vmul.f32 %v1660, %v1682
  %v1684 = vmul.f32 %v1662, %v1682
  %v1685 = vmul.f32 %v1664, %v1682
  %v1686 = vmul.f32 %v1666, %v1682
  %v1687 = vmul.f32 %v1668, %v1682
  %v1688 = vmul.f32 %v1670, %v1682
  %v1689 = vmul.f32 %v1672, %v1682
  %v1690 = vmul.f32 %v1674, %v1682
  %v1691 = vld [vmem:[%s7] sm:$0x1]
  %v1693 = vlaneseq
  %v1694 = vshrl.u32 %v1693, 7
  %v1695 = vsub.s32 0, %v1694
  %v1696 = vrot.slane %v1691, %v1695
  %v1698 = vmul.f32 %v1683, %v1696
  %v1699 = vmul.f32 %v1684, %v1696
  %v1700 = vmul.f32 %v1685, %v1696
  %v1701 = vmul.f32 %v1686, %v1696
  %v1702 = vmul.f32 %v1687, %v1696
  %v1703 = vmul.f32 %v1688, %v1696
  %v1704 = vmul.f32 %v1689, %v1696
  %v1705 = vmul.f32 %v1690, %v1696
  %v1706 = vsel %vm221, %v1698, 0.0
  %1707 = vadd.xlane.f32.xlu0 %v1706
  %v1708 = vpop.xlane.xlu0 %1707
  %v1709 = vsel %vm221, %v1699, 0.0
  %1710 = vadd.xlane.f32.xlu0 %v1709
  %v1711 = vpop.xlane.xlu0 %1710
  %v1712 = vsel %vm221, %v1700, 0.0
  %1713 = vadd.xlane.f32.xlu0 %v1712
  %v1714 = vpop.xlane.xlu0 %1713
  %v1715 = vsel %vm221, %v1701, 0.0
  %1716 = vadd.xlane.f32.xlu0 %v1715
  %v1717 = vpop.xlane.xlu0 %1716
  %v1718 = vsel %vm221, %v1702, 0.0
  %1719 = vadd.xlane.f32.xlu0 %v1718
  %v1720 = vpop.xlane.xlu0 %1719
  %v1721 = vsel %vm221, %v1703, 0.0
  %1722 = vadd.xlane.f32.xlu0 %v1721
  %v1723 = vpop.xlane.xlu0 %1722
  %v1724 = vsel %vm221, %v1704, 0.0
  %1725 = vadd.xlane.f32.xlu0 %v1724
  %v1726 = vpop.xlane.xlu0 %1725
  %v1727 = vsel %vm221, %v1705, 0.0
  %1728 = vadd.xlane.f32.xlu0 %v1727
  %v1729 = vpop.xlane.xlu0 %1728
  %v1730 = vld [vmem:[#allocation4] sm:$0x1]
  %v1732 = vlaneseq
  %v1733 = vshrl.u32 %v1732, 7
  %v1734 = vsub.s32 0, %v1733
  %v1735 = vrot.slane %v1730, %v1734
  %v1737 = vadd.f32 %v1708, %v1735
  %v1738 = vadd.f32 %v1711, %v1735
  %v1739 = vadd.f32 %v1714, %v1735
  %v1740 = vadd.f32 %v1717, %v1735
  %v1741 = vadd.f32 %v1720, %v1735
  %v1742 = vadd.f32 %v1723, %v1735
  %v1743 = vadd.f32 %v1726, %v1735
  %v1744 = vadd.f32 %v1729, %v1735
  %vm1745 = vcmask 7168
  %1746 = vst.msk [vmem:[%s9] sm:$0xff] %vm1745, %v1737
  %1747 = vst.msk [vmem:[%s9 + $0x8] sm:$0xff] %vm1745, %v1738
  %1748 = vst.msk [vmem:[%s9 + $0x10] sm:$0xff] %vm1745, %v1739
  %1749 = vst.msk [vmem:[%s9 + $0x18] sm:$0xff] %vm1745, %v1740
  %1750 = vst.msk [vmem:[%s9 + $0x20] sm:$0xff] %vm1745, %v1741
  %1751 = vst.msk [vmem:[%s9 + $0x28] sm:$0xff] %vm1745, %v1742
  %1752 = vst.msk [vmem:[%s9 + $0x30] sm:$0xff] %vm1745, %v1743
  %1753 = vst.msk [vmem:[%s9 + $0x38] sm:$0xff] %vm1745, %v1744
  // Predicated region
  $region38: #{net_forward.1} parent=0 // pred_check
    _
  $region39: #{net_forward.1} parent=0 // pred_check_branch
    %1755 = sbr.rel (0) target = $region41
  $region40: #{net_forward.1} parent=0 // pred_region
    _
  $region41: #{net_forward.1} parent=0 // pred_fallthru
    _
  // Predicated region
  $region42: #{net_forward.1} parent=0 // pred_check
    _
  $region43: #{net_forward.1} parent=0 // pred_check_branch
    %1757 = sbr.rel (0) target = $region45
  $region44: #{net_forward.1} parent=0 // pred_region
    _
  $region45: #{net_forward.1} parent=0 // pred_fallthru
    _

</llo_original>
